<compile_context>
chip_gen: v7x
topology: tpu7x:2x2x1
jax: 0.10.0
libtpu: 0.0.40
codegen_flags: <defaults>
</compile_context>

<pallas_src>
import functools

import jax
import jax.numpy as jnp
from jax.experimental import pallas as pl
from jax.experimental.pallas import tpu as pltpu

EPS = 1e-5  # PyTorch InstanceNorm2d default eps


def _resnet_block_kernel(x_ref, w1_ref, b1_ref, w2_ref, b2_ref, o_ref, col_ref,
                         *, img_h, img_w):
    """Fused ResnetBlock forward, channels-major.

    x_ref / o_ref : (IMGS, C, H*W)  -- spatial flattened on the lane axis
    w*_ref        : (Cout, 9*Cin)   -- tap-major (dy, dx, cin) columns
    b*_ref        : (Cout, 1)
    col_ref       : (9*C, H*W) VMEM im2col scratch, reused for both convs
    """
    imgs, C, HW = x_ref.shape
    assert HW == img_h * img_w

    w1 = w1_ref[...]
    b1 = b1_ref[...]
    w2 = w2_ref[...]
    b2 = b2_ref[...]

    # Lane-position masks over the flattened spatial axis (computed once,
    # reused for every tap / conv / image).
    pos = jax.lax.broadcasted_iota(jnp.int32, (C, HW), 1)
    row_first = pos < img_w                     # h == 0
    row_last = pos >= HW - img_w                # h == H-1
    col_first = (pos % img_w) == 0              # w == 0
    col_last = (pos % img_w) == (img_w - 1)     # w == W-1

    # pltpu.roll matches jnp.roll:  roll(v, k, 1)[:, p] == v[:, (p - k) % HW]
    def shift_h(v, dh):
        """v shifted by dh rows with reflect(1) boundary.  v: (C, HW)."""
        if dh == 0:
            return v
        down = pltpu.roll(v, img_w, 1)            # row h <- row h-1
        up = pltpu.roll(v, HW - img_w, 1)         # row h <- row h+1
        if dh == -1:                              # row 0 reflects to row 1
            return jnp.where(row_first, up, down)
        return jnp.where(row_last, down, up)      # dh=+1: row H-1 <- row H-2

    def shift_w(v, dw):
        """v shifted by dw cols with reflect(1) boundary."""
        if dw == 0:
            return v
        right = pltpu.roll(v, 1, 1)               # col w <- col w-1
        left = pltpu.roll(v, HW - 1, 1)           # col w <- col w+1
        if dw == -1:                              # col 0 reflects to col 1
            return jnp.where(col_first, left, right)
        return jnp.where(col_last, right, left)   # dw=+1: col W-1 <- col W-2

    def conv3x3(v, w_mat, b):
        """Reflect-pad(1) + 3x3 conv as one im2col MXU dot.  v: (C, HW) f32."""
        for dy in range(3):
            vh = shift_h(v, dy - 1)
            for dx in range(3):
                t = dy * 3 + dx
                col_ref[t * C:(t + 1) * C, :] = shift_w(vh, dx - 1)
        # TODO(synk): for production channel counts cast col_ref / w_mat to
        # bf16 (keep f32 accumulation) on v6e/v7x.
        out = jnp.dot(w_mat, col_ref[...], preferred_element_type=jnp.float32)
        return out + b                            # (Cout, HW)

    def instance_norm(h):
        """Per-channel norm over spatial, biased variance.  h: (C, HW) f32."""
        mean = jnp.mean(h, axis=1, keepdims=True)
        centered = h - mean
        var = jnp.mean(centered * centered, axis=1, keepdims=True)
        return centered * jax.lax.rsqrt(var + EPS)

    for i in range(imgs):                         # static unroll over images in block
        x = x_ref[i].astype(jnp.float32)          # (C, HW)
        h = conv3x3(x, w1, b1)
        h = jnp.maximum(instance_norm(h), 0.0)
        h2 = conv3x3(h, w2, b2)
        h2 = instance_norm(h2)
        o_ref[i] = (x + h2).astype(o_ref.dtype)


def resnet_block_nchw(x, w1, b1, w2, b2, *, imgs_per_step=None):
    """ResnetBlock forward with PyTorch semantics: out = x + conv_block(x).

    x  : (N, C, H, W) NCHW
    w* : (3, 3, Cin, Cout) HWIO  (PyTorch OIHW weight.permute(2, 3, 1, 0))
    b* : (1, C)
    """
    N, C, H, W = x.shape
    assert H >= 2 and W >= 2, "ReflectionPad2d(1) needs H, W >= 2"
    HW = H * W

    x_flat = x.reshape(N, C, HW)                  # free reshape, no transpose
    # HWIO (dy, dx, cin, cout) -> (cout, 9*cin), tap-major; cast once here.
    w1m = jnp.transpose(w1, (3, 0, 1, 2)).reshape(C, 9 * C).astype(jnp.float32)
    w2m = jnp.transpose(w2, (3, 0, 1, 2)).reshape(C, 9 * C).astype(jnp.float32)
    b1c = b1.reshape(C, 1).astype(jnp.float32)
    b2c = b2.reshape(C, 1).astype(jnp.float32)

    if imgs_per_step is None:
        # Whole batch per grid step when it fits a modest VMEM budget
        # (amortizes ~0.35us per-step overhead; in/out blocks double-buffer).
        budget = 4 * 1024 * 1024
        imgs_per_step = max(1, min(N, budget // (C * HW * 4)))
    while N % imgs_per_step:
        imgs_per_step -= 1
    grid = (N // imgs_per_step,)

    kernel = functools.partial(_resnet_block_kernel, img_h=H, img_w=W)

    # TODO(synk): for production image sizes (esp. v7x's 64 MiB VMEM) add a
    # spatially tiled path (H tiles + 1-row halo) with two-pass InstanceNorm
    # (per-channel sum/sumsq accumulated across tiles), and cap imgs_per_step
    # at ceil(N/2) on v7x so the batch axis feeds both TensorCores.
    out_flat = pl.pallas_call(
        kernel,
        out_shape=jax.ShapeDtypeStruct((N, C, HW), x.dtype),
        grid=grid,
        in_specs=[
            pl.BlockSpec((imgs_per_step, C, HW), lambda n: (n, 0, 0)),  # x
            pl.BlockSpec((C, 9 * C), lambda n: (0, 0)),   # w1 (resident, const idx)
            pl.BlockSpec((C, 1), lambda n: (0, 0)),       # b1
            pl.BlockSpec((C, 9 * C), lambda n: (0, 0)),   # w2
            pl.BlockSpec((C, 1), lambda n: (0, 0)),       # b2
        ],
        out_specs=pl.BlockSpec((imgs_per_step, C, HW), lambda n: (n, 0, 0)),
        scratch_shapes=[pltpu.VMEM((9 * C, HW), jnp.float32)],  # im2col scratch
        compiler_params=pltpu.CompilerParams(
            dimension_semantics=("parallel",),
            # Tiny footprint at these sizes; raise for production whole-image
            # blocks on v5e/v6e (128 MiB physical), keep tighter on v7x.
            vmem_limit_bytes=32 * 1024 * 1024,
        ),
    )(x_flat, w1m, b1c, w2m, b2c)
    return out_flat.reshape(N, C, H, W)


def _reference_nchw(x, w1, b1, w2, b2):
    """Pure-JAX reference of the same forward, for verification."""
    def conv(h, w, b):
        hp = jnp.pad(h, ((0, 0), (0, 0), (1, 1), (1, 1)), mode="reflect")
        out = jax.lax.conv_general_dilated(
            hp, w, (1, 1), "VALID",
            dimension_numbers=("NCHW", "HWIO", "NCHW"),
            precision=jax.lax.Precision.HIGHEST)
        return out + b.reshape(1, -1, 1, 1)

    def inorm(h):
        m = jnp.mean(h, axis=(2, 3), keepdims=True)
        v = jnp.mean((h - m) ** 2, axis=(2, 3), keepdims=True)
        return (h - m) * jax.lax.rsqrt(v + EPS)

    h = jnp.maximum(inorm(conv(x, w1, b1)), 0.0)
    h = inorm(conv(h, w2, b2))
    return x + h


if __name__ == "__main__":
    # dim=4, padding_type='reflect', norm_layer=InstanceNorm2d(affine=False),
    # use_dropout=False, use_bias=True
    N, C, H, W = 2, 4, 16, 16
    key = jax.random.PRNGKey(0)
    k = jax.random.split(key, 5)

    x_nchw = jax.random.normal(k[0], (N, C, H, W), jnp.float32)
    w1 = 0.1 * jax.random.normal(k[1], (3, 3, C, C), jnp.float32)   # HWIO
    b1 = 0.1 * jax.random.normal(k[2], (1, C), jnp.float32)
    w2 = 0.1 * jax.random.normal(k[3], (3, 3, C, C), jnp.float32)
    b2 = 0.1 * jax.random.normal(k[4], (1, C), jnp.float32)

    out = resnet_block_nchw(x_nchw, w1, b1, w2, b2)
    out = jax.block_until_ready(out)

    # correctness check vs pure-JAX reference
    ref = _reference_nchw(x_nchw, w1, b1, w2, b2)
    assert out.shape == (N, C, H, W)
    assert jnp.allclose(out, ref, rtol=1e-3, atol=1e-3), "mismatch vs reference"

    print("KERNEL_OK")
</pallas_src>

<mosaic_0001>
module attributes {stable_mosaic.version = 11 : i64} {
  func.func @_resnet_block_kernel(%arg0: i32, %arg1: memref<2x4x256xf32, #tpu.memory_space<vmem>>, %arg2: memref<4x36xf32, #tpu.memory_space<vmem>>, %arg3: memref<4x1xf32, #tpu.memory_space<vmem>>, %arg4: memref<4x36xf32, #tpu.memory_space<vmem>>, %arg5: memref<4x1xf32, #tpu.memory_space<vmem>>, %arg6: memref<2x4x256xf32, #tpu.memory_space<vmem>>, %arg7: memref<36x256xf32, #tpu.memory_space<vmem>>) attributes {dimension_semantics = [#tpu.dimension_semantics<parallel>], iteration_bounds = array<i64: 1>, scalar_prefetch = 0 : i64, scratch_operands = 1 : i64, tpu.core_type = #tpu.core_type<tc>, window_params = [{transform_indices = @transform_0, window_bounds = array<i64: 2, 4, 256>}, {pipeline_mode = #tpu.pipeline_mode<synchronous>, transform_indices = @transform_1, window_bounds = array<i64: 4, 36>}, {pipeline_mode = #tpu.pipeline_mode<synchronous>, transform_indices = @transform_2, window_bounds = array<i64: 4, 1>}, {pipeline_mode = #tpu.pipeline_mode<synchronous>, transform_indices = @transform_3, window_bounds = array<i64: 4, 36>}, {pipeline_mode = #tpu.pipeline_mode<synchronous>, transform_indices = @transform_4, window_bounds = array<i64: 4, 1>}, {transform_indices = @transform_5, window_bounds = array<i64: 2, 4, 256>}]} {
    %c0 = arith.constant 0 : index
    %c0_0 = arith.constant 0 : index
    %0 = vector.load %arg2[%c0, %c0_0] : memref<4x36xf32, #tpu.memory_space<vmem>>, vector<4x36xf32>
    %c0_1 = arith.constant 0 : index
    %c0_2 = arith.constant 0 : index
    %1 = vector.load %arg3[%c0_1, %c0_2] : memref<4x1xf32, #tpu.memory_space<vmem>>, vector<4x1xf32>
    %c0_3 = arith.constant 0 : index
    %c0_4 = arith.constant 0 : index
    %2 = vector.load %arg4[%c0_3, %c0_4] : memref<4x36xf32, #tpu.memory_space<vmem>>, vector<4x36xf32>
    %c0_5 = arith.constant 0 : index
    %c0_6 = arith.constant 0 : index
    %3 = vector.load %arg5[%c0_5, %c0_6] : memref<4x1xf32, #tpu.memory_space<vmem>>, vector<4x1xf32>
    %4 = tpu.iota {dimensions = array<i32: 1>} : vector<4x256xi32>
    %c16_i32 = arith.constant 16 : i32
    %5 = vector.broadcast %c16_i32 : i32 to vector<4x256xi32>
    %6 = arith.cmpi slt, %4, %5 : vector<4x256xi32>
    %c240_i32 = arith.constant 240 : i32
    %7 = vector.broadcast %c240_i32 : i32 to vector<4x256xi32>
    %8 = arith.cmpi sge, %4, %7 : vector<4x256xi32>
    %c16_i32_7 = arith.constant 16 : i32
    %c0_i32 = arith.constant 0 : i32
    %9 = arith.cmpi eq, %c16_i32_7, %c0_i32 : i32
    %c1_i32 = arith.constant 1 : i32
    %10 = arith.select %9, %c1_i32, %c16_i32_7 : i32
    %11 = vector.broadcast %10 : i32 to vector<4x256xi32>
    %12 = arith.remsi %4, %11 : vector<4x256xi32>
    %c0_i32_8 = arith.constant 0 : i32
    %13 = vector.broadcast %c0_i32_8 : i32 to vector<4x256xi32>
    %14 = arith.cmpi ne, %12, %13 : vector<4x256xi32>
    %c0_i32_9 = arith.constant 0 : i32
    %15 = vector.broadcast %c0_i32_9 : i32 to vector<4x256xi32>
    %16 = arith.cmpi slt, %12, %15 : vector<4x256xi32>
    %c0_i32_10 = arith.constant 0 : i32
    %17 = arith.cmpi slt, %10, %c0_i32_10 : i32
    %18 = vector.broadcast %17 : i1 to vector<4x256xi1>
    %19 = vector.broadcast %18 : vector<4x256xi1> to vector<4x256xi1>
    %20 = arith.xori %16, %19 : vector<4x256xi1>
    %21 = arith.andi %20, %14 : vector<4x256xi1>
    %22 = vector.broadcast %10 : i32 to vector<4x256xi32>
    %23 = arith.addi %12, %22 : vector<4x256xi32>
    %24 = arith.select %21, %23, %12 : vector<4x256xi1>, vector<4x256xi32>
    %c0_i32_11 = arith.constant 0 : i32
    %25 = vector.broadcast %c0_i32_11 : i32 to vector<4x256xi32>
    %26 = arith.cmpi eq, %24, %25 : vector<4x256xi32>
    %c16_i32_12 = arith.constant 16 : i32
    %c0_i32_13 = arith.constant 0 : i32
    %27 = arith.cmpi eq, %c16_i32_12, %c0_i32_13 : i32
    %c1_i32_14 = arith.constant 1 : i32
    %28 = arith.select %27, %c1_i32_14, %c16_i32_12 : i32
    %29 = vector.broadcast %28 : i32 to vector<4x256xi32>
    %30 = arith.remsi %4, %29 : vector<4x256xi32>
    %c0_i32_15 = arith.constant 0 : i32
    %31 = vector.broadcast %c0_i32_15 : i32 to vector<4x256xi32>
    %32 = arith.cmpi ne, %30, %31 : vector<4x256xi32>
    %c0_i32_16 = arith.constant 0 : i32
    %33 = vector.broadcast %c0_i32_16 : i32 to vector<4x256xi32>
    %34 = arith.cmpi slt, %30, %33 : vector<4x256xi32>
    %c0_i32_17 = arith.constant 0 : i32
    %35 = arith.cmpi slt, %28, %c0_i32_17 : i32
    %36 = vector.broadcast %35 : i1 to vector<4x256xi1>
    %37 = vector.broadcast %36 : vector<4x256xi1> to vector<4x256xi1>
    %38 = arith.xori %34, %37 : vector<4x256xi1>
    %39 = arith.andi %38, %32 : vector<4x256xi1>
    %40 = vector.broadcast %28 : i32 to vector<4x256xi32>
    %41 = arith.addi %30, %40 : vector<4x256xi32>
    %42 = arith.select %39, %41, %30 : vector<4x256xi1>, vector<4x256xi32>
    %c15_i32 = arith.constant 15 : i32
    %43 = vector.broadcast %c15_i32 : i32 to vector<4x256xi32>
    %44 = arith.cmpi eq, %42, %43 : vector<4x256xi32>
    %c0_18 = arith.constant 0 : index
    %c0_19 = arith.constant 0 : index
    %c0_20 = arith.constant 0 : index
    %45 = vector.load %arg1[%c0_18, %c0_19, %c0_20] : memref<2x4x256xf32, #tpu.memory_space<vmem>>, vector<1x4x256xf32>
    %46 = vector.shape_cast %45 : vector<1x4x256xf32> to vector<4x256xf32>
    %c16_i32_21 = arith.constant 16 : i32
    %47 = tpu.dynamic_rotate %46 by %c16_i32_21 dim 1 : vector<4x256xf32>, i32 -> vector<4x256xf32>
    %c240_i32_22 = arith.constant 240 : i32
    %48 = tpu.dynamic_rotate %46 by %c240_i32_22 dim 1 : vector<4x256xf32>, i32 -> vector<4x256xf32>
    %49 = arith.select %6, %48, %47 : vector<4x256xi1>, vector<4x256xf32>
    %c1_i32_23 = arith.constant 1 : i32
    %50 = tpu.dynamic_rotate %49 by %c1_i32_23 dim 1 : vector<4x256xf32>, i32 -> vector<4x256xf32>
    %c255_i32 = arith.constant 255 : i32
    %51 = tpu.dynamic_rotate %49 by %c255_i32 dim 1 : vector<4x256xf32>, i32 -> vector<4x256xf32>
    %52 = arith.select %26, %51, %50 : vector<4x256xi1>, vector<4x256xf32>
    %c0_24 = arith.constant 0 : index
    %c0_25 = arith.constant 0 : index
    %53 = vector.load %arg7[%c0_24, %c0_25] : memref<36x256xf32, #tpu.memory_space<vmem>>, vector<4x256xf32>
    tpu.vector_store %arg7[%c0_24, %c0_25], %52 {strides = array<i32>} : memref<36x256xf32, #tpu.memory_space<vmem>>, vector<4x256xf32>,
    %c4 = arith.constant 4 : index
    %c0_26 = arith.constant 0 : index
    %54 = vector.load %arg7[%c4, %c0_26] : memref<36x256xf32, #tpu.memory_space<vmem>>, vector<4x256xf32>
    tpu.vector_store %arg7[%c4, %c0_26], %49 {strides = array<i32>} : memref<36x256xf32, #tpu.memory_space<vmem>>, vector<4x256xf32>,
    %c1_i32_27 = arith.constant 1 : i32
    %55 = tpu.dynamic_rotate %49 by %c1_i32_27 dim 1 : vector<4x256xf32>, i32 -> vector<4x256xf32>
    %c255_i32_28 = arith.constant 255 : i32
    %56 = tpu.dynamic_rotate %49 by %c255_i32_28 dim 1 : vector<4x256xf32>, i32 -> vector<4x256xf32>
    %57 = arith.select %44, %55, %56 : vector<4x256xi1>, vector<4x256xf32>
    %c8 = arith.constant 8 : index
    %c0_29 = arith.constant 0 : index
    %58 = vector.load %arg7[%c8, %c0_29] : memref<36x256xf32, #tpu.memory_space<vmem>>, vector<4x256xf32>
    tpu.vector_store %arg7[%c8, %c0_29], %57 {strides = array<i32>} : memref<36x256xf32, #tpu.memory_space<vmem>>, vector<4x256xf32>,
    %c1_i32_30 = arith.constant 1 : i32
    %59 = tpu.dynamic_rotate %46 by %c1_i32_30 dim 1 : vector<4x256xf32>, i32 -> vector<4x256xf32>
    %c255_i32_31 = arith.constant 255 : i32
    %60 = tpu.dynamic_rotate %46 by %c255_i32_31 dim 1 : vector<4x256xf32>, i32 -> vector<4x256xf32>
    %61 = arith.select %26, %60, %59 : vector<4x256xi1>, vector<4x256xf32>
    %c12 = arith.constant 12 : index
    %c0_32 = arith.constant 0 : index
    %62 = vector.load %arg7[%c12, %c0_32] : memref<36x256xf32, #tpu.memory_space<vmem>>, vector<4x256xf32>
    tpu.vector_store %arg7[%c12, %c0_32], %61 {strides = array<i32>} : memref<36x256xf32, #tpu.memory_space<vmem>>, vector<4x256xf32>,
    %c16 = arith.constant 16 : index
    %c0_33 = arith.constant 0 : index
    %63 = vector.load %arg7[%c16, %c0_33] : memref<36x256xf32, #tpu.memory_space<vmem>>, vector<4x256xf32>
    tpu.vector_store %arg7[%c16, %c0_33], %46 {strides = array<i32>} : memref<36x256xf32, #tpu.memory_space<vmem>>, vector<4x256xf32>,
    %c1_i32_34 = arith.constant 1 : i32
    %64 = tpu.dynamic_rotate %46 by %c1_i32_34 dim 1 : vector<4x256xf32>, i32 -> vector<4x256xf32>
    %c255_i32_35 = arith.constant 255 : i32
    %65 = tpu.dynamic_rotate %46 by %c255_i32_35 dim 1 : vector<4x256xf32>, i32 -> vector<4x256xf32>
    %66 = arith.select %44, %64, %65 : vector<4x256xi1>, vector<4x256xf32>
    %c20 = arith.constant 20 : index
    %c0_36 = arith.constant 0 : index
    %67 = vector.load %arg7[%c20, %c0_36] : memref<36x256xf32, #tpu.memory_space<vmem>>, vector<4x256xf32>
    tpu.vector_store %arg7[%c20, %c0_36], %66 {strides = array<i32>} : memref<36x256xf32, #tpu.memory_space<vmem>>, vector<4x256xf32>,
    %c16_i32_37 = arith.constant 16 : i32
    %68 = tpu.dynamic_rotate %46 by %c16_i32_37 dim 1 : vector<4x256xf32>, i32 -> vector<4x256xf32>
    %c240_i32_38 = arith.constant 240 : i32
    %69 = tpu.dynamic_rotate %46 by %c240_i32_38 dim 1 : vector<4x256xf32>, i32 -> vector<4x256xf32>
    %70 = arith.select %8, %68, %69 : vector<4x256xi1>, vector<4x256xf32>
    %c1_i32_39 = arith.constant 1 : i32
    %71 = tpu.dynamic_rotate %70 by %c1_i32_39 dim 1 : vector<4x256xf32>, i32 -> vector<4x256xf32>
    %c255_i32_40 = arith.constant 255 : i32
    %72 = tpu.dynamic_rotate %70 by %c255_i32_40 dim 1 : vector<4x256xf32>, i32 -> vector<4x256xf32>
    %73 = arith.select %26, %72, %71 : vector<4x256xi1>, vector<4x256xf32>
    %c24 = arith.constant 24 : index
    %c0_41 = arith.constant 0 : index
    %74 = vector.load %arg7[%c24, %c0_41] : memref<36x256xf32, #tpu.memory_space<vmem>>, vector<4x256xf32>
    tpu.vector_store %arg7[%c24, %c0_41], %73 {strides = array<i32>} : memref<36x256xf32, #tpu.memory_space<vmem>>, vector<4x256xf32>,
    %c28 = arith.constant 28 : index
    %c0_42 = arith.constant 0 : index
    %75 = vector.load %arg7[%c28, %c0_42] : memref<36x256xf32, #tpu.memory_space<vmem>>, vector<4x256xf32>
    tpu.vector_store %arg7[%c28, %c0_42], %70 {strides = array<i32>} : memref<36x256xf32, #tpu.memory_space<vmem>>, vector<4x256xf32>,
    %c1_i32_43 = arith.constant 1 : i32
    %76 = tpu.dynamic_rotate %70 by %c1_i32_43 dim 1 : vector<4x256xf32>, i32 -> vector<4x256xf32>
    %c255_i32_44 = arith.constant 255 : i32
    %77 = tpu.dynamic_rotate %70 by %c255_i32_44 dim 1 : vector<4x256xf32>, i32 -> vector<4x256xf32>
    %78 = arith.select %44, %76, %77 : vector<4x256xi1>, vector<4x256xf32>
    %c32 = arith.constant 32 : index
    %c0_45 = arith.constant 0 : index
    %79 = vector.load %arg7[%c32, %c0_45] : memref<36x256xf32, #tpu.memory_space<vmem>>, vector<4x256xf32>
    tpu.vector_store %arg7[%c32, %c0_45], %78 {strides = array<i32>} : memref<36x256xf32, #tpu.memory_space<vmem>>, vector<4x256xf32>,
    %c0_46 = arith.constant 0 : index
    %c0_47 = arith.constant 0 : index
    %80 = vector.load %arg7[%c0_46, %c0_47] : memref<36x256xf32, #tpu.memory_space<vmem>>, vector<36x256xf32>
    %cst = arith.constant dense<0.000000e+00> : vector<4x256xf32>
    %81 = tpu.matmul %0, %80, %cst {dimension_numbers = #tpu.dot_dimension_numbers<[1], [0], [0], [1], [0, 0, 1, 1], [], []>} : vector<4x36xf32>, vector<36x256xf32>, vector<4x256xf32> -> vector<4x256xf32>
    %82 = vector.broadcast %1 : vector<4x1xf32> to vector<4x256xf32>
    %83 = arith.addf %81, %82 : vector<4x256xf32>
    %cst_48 = arith.constant dense<0.000000e+00> : vector<4xf32>
    %84 = vector.multi_reduction <add>, %83, %cst_48 [1] : vector<4x256xf32> to vector<4xf32>
    %85 = vector.shape_cast %84 : vector<4xf32> to vector<4x1xf32>
    %cst_49 = arith.constant 2.560000e+02 : f32
    %86 = vector.broadcast %cst_49 : f32 to vector<4x1xf32>
    %87 = arith.divf %85, %86 : vector<4x1xf32>
    %88 = vector.broadcast %87 : vector<4x1xf32> to vector<4x256xf32>
    %89 = arith.subf %83, %88 : vector<4x256xf32>
    %90 = arith.mulf %89, %89 : vector<4x256xf32>
    %cst_50 = arith.constant dense<0.000000e+00> : vector<4xf32>
    %91 = vector.multi_reduction <add>, %90, %cst_50 [1] : vector<4x256xf32> to vector<4xf32>
    %92 = vector.shape_cast %91 : vector<4xf32> to vector<4x1xf32>
    %cst_51 = arith.constant 2.560000e+02 : f32
    %93 = vector.broadcast %cst_51 : f32 to vector<4x1xf32>
    %94 = arith.divf %92, %93 : vector<4x1xf32>
    %cst_52 = arith.constant 9.99999974E-6 : f32
    %95 = vector.broadcast %cst_52 : f32 to vector<4x1xf32>
    %96 = arith.addf %94, %95 : vector<4x1xf32>
    %97 = math.rsqrt %96 : vector<4x1xf32>
    %98 = vector.broadcast %97 : vector<4x1xf32> to vector<4x256xf32>
    %99 = arith.mulf %89, %98 : vector<4x256xf32>
    %cst_53 = arith.constant 0.000000e+00 : f32
    %100 = vector.broadcast %cst_53 : f32 to vector<4x256xf32>
    %101 = arith.maximumf %99, %100 : vector<4x256xf32>
    %c16_i32_54 = arith.constant 16 : i32
    %102 = tpu.dynamic_rotate %101 by %c16_i32_54 dim 1 : vector<4x256xf32>, i32 -> vector<4x256xf32>
    %c240_i32_55 = arith.constant 240 : i32
    %103 = tpu.dynamic_rotate %101 by %c240_i32_55 dim 1 : vector<4x256xf32>, i32 -> vector<4x256xf32>
    %104 = arith.select %6, %103, %102 : vector<4x256xi1>, vector<4x256xf32>
    %c1_i32_56 = arith.constant 1 : i32
    %105 = tpu.dynamic_rotate %104 by %c1_i32_56 dim 1 : vector<4x256xf32>, i32 -> vector<4x256xf32>
    %c255_i32_57 = arith.constant 255 : i32
    %106 = tpu.dynamic_rotate %104 by %c255_i32_57 dim 1 : vector<4x256xf32>, i32 -> vector<4x256xf32>
    %107 = arith.select %26, %106, %105 : vector<4x256xi1>, vector<4x256xf32>
    %c0_58 = arith.constant 0 : index
    %c0_59 = arith.constant 0 : index
    %108 = vector.load %arg7[%c0_58, %c0_59] : memref<36x256xf32, #tpu.memory_space<vmem>>, vector<4x256xf32>
    tpu.vector_store %arg7[%c0_58, %c0_59], %107 {strides = array<i32>} : memref<36x256xf32, #tpu.memory_space<vmem>>, vector<4x256xf32>,
    %c4_60 = arith.constant 4 : index
    %c0_61 = arith.constant 0 : index
    %109 = vector.load %arg7[%c4_60, %c0_61] : memref<36x256xf32, #tpu.memory_space<vmem>>, vector<4x256xf32>
    tpu.vector_store %arg7[%c4_60, %c0_61], %104 {strides = array<i32>} : memref<36x256xf32, #tpu.memory_space<vmem>>, vector<4x256xf32>,
    %c1_i32_62 = arith.constant 1 : i32
    %110 = tpu.dynamic_rotate %104 by %c1_i32_62 dim 1 : vector<4x256xf32>, i32 -> vector<4x256xf32>
    %c255_i32_63 = arith.constant 255 : i32
    %111 = tpu.dynamic_rotate %104 by %c255_i32_63 dim 1 : vector<4x256xf32>, i32 -> vector<4x256xf32>
    %112 = arith.select %44, %110, %111 : vector<4x256xi1>, vector<4x256xf32>
    %c8_64 = arith.constant 8 : index
    %c0_65 = arith.constant 0 : index
    %113 = vector.load %arg7[%c8_64, %c0_65] : memref<36x256xf32, #tpu.memory_space<vmem>>, vector<4x256xf32>
    tpu.vector_store %arg7[%c8_64, %c0_65], %112 {strides = array<i32>} : memref<36x256xf32, #tpu.memory_space<vmem>>, vector<4x256xf32>,
    %c1_i32_66 = arith.constant 1 : i32
    %114 = tpu.dynamic_rotate %101 by %c1_i32_66 dim 1 : vector<4x256xf32>, i32 -> vector<4x256xf32>
    %c255_i32_67 = arith.constant 255 : i32
    %115 = tpu.dynamic_rotate %101 by %c255_i32_67 dim 1 : vector<4x256xf32>, i32 -> vector<4x256xf32>
    %116 = arith.select %26, %115, %114 : vector<4x256xi1>, vector<4x256xf32>
    %c12_68 = arith.constant 12 : index
    %c0_69 = arith.constant 0 : index
    %117 = vector.load %arg7[%c12_68, %c0_69] : memref<36x256xf32, #tpu.memory_space<vmem>>, vector<4x256xf32>
    tpu.vector_store %arg7[%c12_68, %c0_69], %116 {strides = array<i32>} : memref<36x256xf32, #tpu.memory_space<vmem>>, vector<4x256xf32>,
    %c16_70 = arith.constant 16 : index
    %c0_71 = arith.constant 0 : index
    %118 = vector.load %arg7[%c16_70, %c0_71] : memref<36x256xf32, #tpu.memory_space<vmem>>, vector<4x256xf32>
    tpu.vector_store %arg7[%c16_70, %c0_71], %101 {strides = array<i32>} : memref<36x256xf32, #tpu.memory_space<vmem>>, vector<4x256xf32>,
    %c1_i32_72 = arith.constant 1 : i32
    %119 = tpu.dynamic_rotate %101 by %c1_i32_72 dim 1 : vector<4x256xf32>, i32 -> vector<4x256xf32>
    %c255_i32_73 = arith.constant 255 : i32
    %120 = tpu.dynamic_rotate %101 by %c255_i32_73 dim 1 : vector<4x256xf32>, i32 -> vector<4x256xf32>
    %121 = arith.select %44, %119, %120 : vector<4x256xi1>, vector<4x256xf32>
    %c20_74 = arith.constant 20 : index
    %c0_75 = arith.constant 0 : index
    %122 = vector.load %arg7[%c20_74, %c0_75] : memref<36x256xf32, #tpu.memory_space<vmem>>, vector<4x256xf32>
    tpu.vector_store %arg7[%c20_74, %c0_75], %121 {strides = array<i32>} : memref<36x256xf32, #tpu.memory_space<vmem>>, vector<4x256xf32>,
    %c16_i32_76 = arith.constant 16 : i32
    %123 = tpu.dynamic_rotate %101 by %c16_i32_76 dim 1 : vector<4x256xf32>, i32 -> vector<4x256xf32>
    %c240_i32_77 = arith.constant 240 : i32
    %124 = tpu.dynamic_rotate %101 by %c240_i32_77 dim 1 : vector<4x256xf32>, i32 -> vector<4x256xf32>
    %125 = arith.select %8, %123, %124 : vector<4x256xi1>, vector<4x256xf32>
    %c1_i32_78 = arith.constant 1 : i32
    %126 = tpu.dynamic_rotate %125 by %c1_i32_78 dim 1 : vector<4x256xf32>, i32 -> vector<4x256xf32>
    %c255_i32_79 = arith.constant 255 : i32
    %127 = tpu.dynamic_rotate %125 by %c255_i32_79 dim 1 : vector<4x256xf32>, i32 -> vector<4x256xf32>
    %128 = arith.select %26, %127, %126 : vector<4x256xi1>, vector<4x256xf32>
    %c24_80 = arith.constant 24 : index
    %c0_81 = arith.constant 0 : index
    %129 = vector.load %arg7[%c24_80, %c0_81] : memref<36x256xf32, #tpu.memory_space<vmem>>, vector<4x256xf32>
    tpu.vector_store %arg7[%c24_80, %c0_81], %128 {strides = array<i32>} : memref<36x256xf32, #tpu.memory_space<vmem>>, vector<4x256xf32>,
    %c28_82 = arith.constant 28 : index
    %c0_83 = arith.constant 0 : index
    %130 = vector.load %arg7[%c28_82, %c0_83] : memref<36x256xf32, #tpu.memory_space<vmem>>, vector<4x256xf32>
    tpu.vector_store %arg7[%c28_82, %c0_83], %125 {strides = array<i32>} : memref<36x256xf32, #tpu.memory_space<vmem>>, vector<4x256xf32>,
    %c1_i32_84 = arith.constant 1 : i32
    %131 = tpu.dynamic_rotate %125 by %c1_i32_84 dim 1 : vector<4x256xf32>, i32 -> vector<4x256xf32>
    %c255_i32_85 = arith.constant 255 : i32
    %132 = tpu.dynamic_rotate %125 by %c255_i32_85 dim 1 : vector<4x256xf32>, i32 -> vector<4x256xf32>
    %133 = arith.select %44, %131, %132 : vector<4x256xi1>, vector<4x256xf32>
    %c32_86 = arith.constant 32 : index
    %c0_87 = arith.constant 0 : index
    %134 = vector.load %arg7[%c32_86, %c0_87] : memref<36x256xf32, #tpu.memory_space<vmem>>, vector<4x256xf32>
    tpu.vector_store %arg7[%c32_86, %c0_87], %133 {strides = array<i32>} : memref<36x256xf32, #tpu.memory_space<vmem>>, vector<4x256xf32>,
    %c0_88 = arith.constant 0 : index
    %c0_89 = arith.constant 0 : index
    %135 = vector.load %arg7[%c0_88, %c0_89] : memref<36x256xf32, #tpu.memory_space<vmem>>, vector<36x256xf32>
    %cst_90 = arith.constant dense<0.000000e+00> : vector<4x256xf32>
    %136 = tpu.matmul %2, %135, %cst_90 {dimension_numbers = #tpu.dot_dimension_numbers<[1], [0], [0], [1], [0, 0, 1, 1], [], []>} : vector<4x36xf32>, vector<36x256xf32>, vector<4x256xf32> -> vector<4x256xf32>
    %137 = vector.broadcast %3 : vector<4x1xf32> to vector<4x256xf32>
    %138 = arith.addf %136, %137 : vector<4x256xf32>
    %cst_91 = arith.constant dense<0.000000e+00> : vector<4xf32>
    %139 = vector.multi_reduction <add>, %138, %cst_91 [1] : vector<4x256xf32> to vector<4xf32>
    %140 = vector.shape_cast %139 : vector<4xf32> to vector<4x1xf32>
    %cst_92 = arith.constant 2.560000e+02 : f32
    %141 = vector.broadcast %cst_92 : f32 to vector<4x1xf32>
    %142 = arith.divf %140, %141 : vector<4x1xf32>
    %143 = vector.broadcast %142 : vector<4x1xf32> to vector<4x256xf32>
    %144 = arith.subf %138, %143 : vector<4x256xf32>
    %145 = arith.mulf %144, %144 : vector<4x256xf32>
    %cst_93 = arith.constant dense<0.000000e+00> : vector<4xf32>
    %146 = vector.multi_reduction <add>, %145, %cst_93 [1] : vector<4x256xf32> to vector<4xf32>
    %147 = vector.shape_cast %146 : vector<4xf32> to vector<4x1xf32>
    %cst_94 = arith.constant 2.560000e+02 : f32
    %148 = vector.broadcast %cst_94 : f32 to vector<4x1xf32>
    %149 = arith.divf %147, %148 : vector<4x1xf32>
    %cst_95 = arith.constant 9.99999974E-6 : f32
    %150 = vector.broadcast %cst_95 : f32 to vector<4x1xf32>
    %151 = arith.addf %149, %150 : vector<4x1xf32>
    %152 = math.rsqrt %151 : vector<4x1xf32>
    %153 = vector.broadcast %152 : vector<4x1xf32> to vector<4x256xf32>
    %154 = arith.mulf %144, %153 : vector<4x256xf32>
    %155 = arith.addf %46, %154 : vector<4x256xf32>
    %c0_96 = arith.constant 0 : index
    %c0_97 = arith.constant 0 : index
    %c0_98 = arith.constant 0 : index
    %156 = vector.load %arg6[%c0_96, %c0_97, %c0_98] : memref<2x4x256xf32, #tpu.memory_space<vmem>>, vector<1x4x256xf32>
    %157 = vector.shape_cast %156 : vector<1x4x256xf32> to vector<4x256xf32>
    %158 = vector.shape_cast %155 : vector<4x256xf32> to vector<1x4x256xf32>
    tpu.vector_store %arg6[%c0_96, %c0_97, %c0_98], %158 {strides = array<i32>} : memref<2x4x256xf32, #tpu.memory_space<vmem>>, vector<1x4x256xf32>,
    %c1 = arith.constant 1 : index
    %c0_99 = arith.constant 0 : index
    %c0_100 = arith.constant 0 : index
    %159 = vector.load %arg1[%c1, %c0_99, %c0_100] : memref<2x4x256xf32, #tpu.memory_space<vmem>>, vector<1x4x256xf32>
    %160 = vector.shape_cast %159 : vector<1x4x256xf32> to vector<4x256xf32>
    %c16_i32_101 = arith.constant 16 : i32
    %161 = tpu.dynamic_rotate %160 by %c16_i32_101 dim 1 : vector<4x256xf32>, i32 -> vector<4x256xf32>
    %c240_i32_102 = arith.constant 240 : i32
    %162 = tpu.dynamic_rotate %160 by %c240_i32_102 dim 1 : vector<4x256xf32>, i32 -> vector<4x256xf32>
    %163 = arith.select %6, %162, %161 : vector<4x256xi1>, vector<4x256xf32>
    %c1_i32_103 = arith.constant 1 : i32
    %164 = tpu.dynamic_rotate %163 by %c1_i32_103 dim 1 : vector<4x256xf32>, i32 -> vector<4x256xf32>
    %c255_i32_104 = arith.constant 255 : i32
    %165 = tpu.dynamic_rotate %163 by %c255_i32_104 dim 1 : vector<4x256xf32>, i32 -> vector<4x256xf32>
    %166 = arith.select %26, %165, %164 : vector<4x256xi1>, vector<4x256xf32>
    %c0_105 = arith.constant 0 : index
    %c0_106 = arith.constant 0 : index
    %167 = vector.load %arg7[%c0_105, %c0_106] : memref<36x256xf32, #tpu.memory_space<vmem>>, vector<4x256xf32>
    tpu.vector_store %arg7[%c0_105, %c0_106], %166 {strides = array<i32>} : memref<36x256xf32, #tpu.memory_space<vmem>>, vector<4x256xf32>,
    %c4_107 = arith.constant 4 : index
    %c0_108 = arith.constant 0 : index
    %168 = vector.load %arg7[%c4_107, %c0_108] : memref<36x256xf32, #tpu.memory_space<vmem>>, vector<4x256xf32>
    tpu.vector_store %arg7[%c4_107, %c0_108], %163 {strides = array<i32>} : memref<36x256xf32, #tpu.memory_space<vmem>>, vector<4x256xf32>,
    %c1_i32_109 = arith.constant 1 : i32
    %169 = tpu.dynamic_rotate %163 by %c1_i32_109 dim 1 : vector<4x256xf32>, i32 -> vector<4x256xf32>
    %c255_i32_110 = arith.constant 255 : i32
    %170 = tpu.dynamic_rotate %163 by %c255_i32_110 dim 1 : vector<4x256xf32>, i32 -> vector<4x256xf32>
    %171 = arith.select %44, %169, %170 : vector<4x256xi1>, vector<4x256xf32>
    %c8_111 = arith.constant 8 : index
    %c0_112 = arith.constant 0 : index
    %172 = vector.load %arg7[%c8_111, %c0_112] : memref<36x256xf32, #tpu.memory_space<vmem>>, vector<4x256xf32>
    tpu.vector_store %arg7[%c8_111, %c0_112], %171 {strides = array<i32>} : memref<36x256xf32, #tpu.memory_space<vmem>>, vector<4x256xf32>,
    %c1_i32_113 = arith.constant 1 : i32
    %173 = tpu.dynamic_rotate %160 by %c1_i32_113 dim 1 : vector<4x256xf32>, i32 -> vector<4x256xf32>
    %c255_i32_114 = arith.constant 255 : i32
    %174 = tpu.dynamic_rotate %160 by %c255_i32_114 dim 1 : vector<4x256xf32>, i32 -> vector<4x256xf32>
    %175 = arith.select %26, %174, %173 : vector<4x256xi1>, vector<4x256xf32>
    %c12_115 = arith.constant 12 : index
    %c0_116 = arith.constant 0 : index
    %176 = vector.load %arg7[%c12_115, %c0_116] : memref<36x256xf32, #tpu.memory_space<vmem>>, vector<4x256xf32>
    tpu.vector_store %arg7[%c12_115, %c0_116], %175 {strides = array<i32>} : memref<36x256xf32, #tpu.memory_space<vmem>>, vector<4x256xf32>,
    %c16_117 = arith.constant 16 : index
    %c0_118 = arith.constant 0 : index
    %177 = vector.load %arg7[%c16_117, %c0_118] : memref<36x256xf32, #tpu.memory_space<vmem>>, vector<4x256xf32>
    tpu.vector_store %arg7[%c16_117, %c0_118], %160 {strides = array<i32>} : memref<36x256xf32, #tpu.memory_space<vmem>>, vector<4x256xf32>,
    %c1_i32_119 = arith.constant 1 : i32
    %178 = tpu.dynamic_rotate %160 by %c1_i32_119 dim 1 : vector<4x256xf32>, i32 -> vector<4x256xf32>
    %c255_i32_120 = arith.constant 255 : i32
    %179 = tpu.dynamic_rotate %160 by %c255_i32_120 dim 1 : vector<4x256xf32>, i32 -> vector<4x256xf32>
    %180 = arith.select %44, %178, %179 : vector<4x256xi1>, vector<4x256xf32>
    %c20_121 = arith.constant 20 : index
    %c0_122 = arith.constant 0 : index
    %181 = vector.load %arg7[%c20_121, %c0_122] : memref<36x256xf32, #tpu.memory_space<vmem>>, vector<4x256xf32>
    tpu.vector_store %arg7[%c20_121, %c0_122], %180 {strides = array<i32>} : memref<36x256xf32, #tpu.memory_space<vmem>>, vector<4x256xf32>,
    %c16_i32_123 = arith.constant 16 : i32
    %182 = tpu.dynamic_rotate %160 by %c16_i32_123 dim 1 : vector<4x256xf32>, i32 -> vector<4x256xf32>
    %c240_i32_124 = arith.constant 240 : i32
    %183 = tpu.dynamic_rotate %160 by %c240_i32_124 dim 1 : vector<4x256xf32>, i32 -> vector<4x256xf32>
    %184 = arith.select %8, %182, %183 : vector<4x256xi1>, vector<4x256xf32>
    %c1_i32_125 = arith.constant 1 : i32
    %185 = tpu.dynamic_rotate %184 by %c1_i32_125 dim 1 : vector<4x256xf32>, i32 -> vector<4x256xf32>
    %c255_i32_126 = arith.constant 255 : i32
    %186 = tpu.dynamic_rotate %184 by %c255_i32_126 dim 1 : vector<4x256xf32>, i32 -> vector<4x256xf32>
    %187 = arith.select %26, %186, %185 : vector<4x256xi1>, vector<4x256xf32>
    %c24_127 = arith.constant 24 : index
    %c0_128 = arith.constant 0 : index
    %188 = vector.load %arg7[%c24_127, %c0_128] : memref<36x256xf32, #tpu.memory_space<vmem>>, vector<4x256xf32>
    tpu.vector_store %arg7[%c24_127, %c0_128], %187 {strides = array<i32>} : memref<36x256xf32, #tpu.memory_space<vmem>>, vector<4x256xf32>,
    %c28_129 = arith.constant 28 : index
    %c0_130 = arith.constant 0 : index
    %189 = vector.load %arg7[%c28_129, %c0_130] : memref<36x256xf32, #tpu.memory_space<vmem>>, vector<4x256xf32>
    tpu.vector_store %arg7[%c28_129, %c0_130], %184 {strides = array<i32>} : memref<36x256xf32, #tpu.memory_space<vmem>>, vector<4x256xf32>,
    %c1_i32_131 = arith.constant 1 : i32
    %190 = tpu.dynamic_rotate %184 by %c1_i32_131 dim 1 : vector<4x256xf32>, i32 -> vector<4x256xf32>
    %c255_i32_132 = arith.constant 255 : i32
    %191 = tpu.dynamic_rotate %184 by %c255_i32_132 dim 1 : vector<4x256xf32>, i32 -> vector<4x256xf32>
    %192 = arith.select %44, %190, %191 : vector<4x256xi1>, vector<4x256xf32>
    %c32_133 = arith.constant 32 : index
    %c0_134 = arith.constant 0 : index
    %193 = vector.load %arg7[%c32_133, %c0_134] : memref<36x256xf32, #tpu.memory_space<vmem>>, vector<4x256xf32>
    tpu.vector_store %arg7[%c32_133, %c0_134], %192 {strides = array<i32>} : memref<36x256xf32, #tpu.memory_space<vmem>>, vector<4x256xf32>,
    %c0_135 = arith.constant 0 : index
    %c0_136 = arith.constant 0 : index
    %194 = vector.load %arg7[%c0_135, %c0_136] : memref<36x256xf32, #tpu.memory_space<vmem>>, vector<36x256xf32>
    %cst_137 = arith.constant dense<0.000000e+00> : vector<4x256xf32>
    %195 = tpu.matmul %0, %194, %cst_137 {dimension_numbers = #tpu.dot_dimension_numbers<[1], [0], [0], [1], [0, 0, 1, 1], [], []>} : vector<4x36xf32>, vector<36x256xf32>, vector<4x256xf32> -> vector<4x256xf32>
    %196 = vector.broadcast %1 : vector<4x1xf32> to vector<4x256xf32>
    %197 = arith.addf %195, %196 : vector<4x256xf32>
    %cst_138 = arith.constant dense<0.000000e+00> : vector<4xf32>
    %198 = vector.multi_reduction <add>, %197, %cst_138 [1] : vector<4x256xf32> to vector<4xf32>
    %199 = vector.shape_cast %198 : vector<4xf32> to vector<4x1xf32>
    %cst_139 = arith.constant 2.560000e+02 : f32
    %200 = vector.broadcast %cst_139 : f32 to vector<4x1xf32>
    %201 = arith.divf %199, %200 : vector<4x1xf32>
    %202 = vector.broadcast %201 : vector<4x1xf32> to vector<4x256xf32>
    %203 = arith.subf %197, %202 : vector<4x256xf32>
    %204 = arith.mulf %203, %203 : vector<4x256xf32>
    %cst_140 = arith.constant dense<0.000000e+00> : vector<4xf32>
    %205 = vector.multi_reduction <add>, %204, %cst_140 [1] : vector<4x256xf32> to vector<4xf32>
    %206 = vector.shape_cast %205 : vector<4xf32> to vector<4x1xf32>
    %cst_141 = arith.constant 2.560000e+02 : f32
    %207 = vector.broadcast %cst_141 : f32 to vector<4x1xf32>
    %208 = arith.divf %206, %207 : vector<4x1xf32>
    %cst_142 = arith.constant 9.99999974E-6 : f32
    %209 = vector.broadcast %cst_142 : f32 to vector<4x1xf32>
    %210 = arith.addf %208, %209 : vector<4x1xf32>
    %211 = math.rsqrt %210 : vector<4x1xf32>
    %212 = vector.broadcast %211 : vector<4x1xf32> to vector<4x256xf32>
    %213 = arith.mulf %203, %212 : vector<4x256xf32>
    %cst_143 = arith.constant 0.000000e+00 : f32
    %214 = vector.broadcast %cst_143 : f32 to vector<4x256xf32>
    %215 = arith.maximumf %213, %214 : vector<4x256xf32>
    %c16_i32_144 = arith.constant 16 : i32
    %216 = tpu.dynamic_rotate %215 by %c16_i32_144 dim 1 : vector<4x256xf32>, i32 -> vector<4x256xf32>
    %c240_i32_145 = arith.constant 240 : i32
    %217 = tpu.dynamic_rotate %215 by %c240_i32_145 dim 1 : vector<4x256xf32>, i32 -> vector<4x256xf32>
    %218 = arith.select %6, %217, %216 : vector<4x256xi1>, vector<4x256xf32>
    %c1_i32_146 = arith.constant 1 : i32
    %219 = tpu.dynamic_rotate %218 by %c1_i32_146 dim 1 : vector<4x256xf32>, i32 -> vector<4x256xf32>
    %c255_i32_147 = arith.constant 255 : i32
    %220 = tpu.dynamic_rotate %218 by %c255_i32_147 dim 1 : vector<4x256xf32>, i32 -> vector<4x256xf32>
    %221 = arith.select %26, %220, %219 : vector<4x256xi1>, vector<4x256xf32>
    %c0_148 = arith.constant 0 : index
    %c0_149 = arith.constant 0 : index
    %222 = vector.load %arg7[%c0_148, %c0_149] : memref<36x256xf32, #tpu.memory_space<vmem>>, vector<4x256xf32>
    tpu.vector_store %arg7[%c0_148, %c0_149], %221 {strides = array<i32>} : memref<36x256xf32, #tpu.memory_space<vmem>>, vector<4x256xf32>,
    %c4_150 = arith.constant 4 : index
    %c0_151 = arith.constant 0 : index
    %223 = vector.load %arg7[%c4_150, %c0_151] : memref<36x256xf32, #tpu.memory_space<vmem>>, vector<4x256xf32>
    tpu.vector_store %arg7[%c4_150, %c0_151], %218 {strides = array<i32>} : memref<36x256xf32, #tpu.memory_space<vmem>>, vector<4x256xf32>,
    %c1_i32_152 = arith.constant 1 : i32
    %224 = tpu.dynamic_rotate %218 by %c1_i32_152 dim 1 : vector<4x256xf32>, i32 -> vector<4x256xf32>
    %c255_i32_153 = arith.constant 255 : i32
    %225 = tpu.dynamic_rotate %218 by %c255_i32_153 dim 1 : vector<4x256xf32>, i32 -> vector<4x256xf32>
    %226 = arith.select %44, %224, %225 : vector<4x256xi1>, vector<4x256xf32>
    %c8_154 = arith.constant 8 : index
    %c0_155 = arith.constant 0 : index
    %227 = vector.load %arg7[%c8_154, %c0_155] : memref<36x256xf32, #tpu.memory_space<vmem>>, vector<4x256xf32>
    tpu.vector_store %arg7[%c8_154, %c0_155], %226 {strides = array<i32>} : memref<36x256xf32, #tpu.memory_space<vmem>>, vector<4x256xf32>,
    %c1_i32_156 = arith.constant 1 : i32
    %228 = tpu.dynamic_rotate %215 by %c1_i32_156 dim 1 : vector<4x256xf32>, i32 -> vector<4x256xf32>
    %c255_i32_157 = arith.constant 255 : i32
    %229 = tpu.dynamic_rotate %215 by %c255_i32_157 dim 1 : vector<4x256xf32>, i32 -> vector<4x256xf32>
    %230 = arith.select %26, %229, %228 : vector<4x256xi1>, vector<4x256xf32>
    %c12_158 = arith.constant 12 : index
    %c0_159 = arith.constant 0 : index
    %231 = vector.load %arg7[%c12_158, %c0_159] : memref<36x256xf32, #tpu.memory_space<vmem>>, vector<4x256xf32>
    tpu.vector_store %arg7[%c12_158, %c0_159], %230 {strides = array<i32>} : memref<36x256xf32, #tpu.memory_space<vmem>>, vector<4x256xf32>,
    %c16_160 = arith.constant 16 : index
    %c0_161 = arith.constant 0 : index
    %232 = vector.load %arg7[%c16_160, %c0_161] : memref<36x256xf32, #tpu.memory_space<vmem>>, vector<4x256xf32>
    tpu.vector_store %arg7[%c16_160, %c0_161], %215 {strides = array<i32>} : memref<36x256xf32, #tpu.memory_space<vmem>>, vector<4x256xf32>,
    %c1_i32_162 = arith.constant 1 : i32
    %233 = tpu.dynamic_rotate %215 by %c1_i32_162 dim 1 : vector<4x256xf32>, i32 -> vector<4x256xf32>
    %c255_i32_163 = arith.constant 255 : i32
    %234 = tpu.dynamic_rotate %215 by %c255_i32_163 dim 1 : vector<4x256xf32>, i32 -> vector<4x256xf32>
    %235 = arith.select %44, %233, %234 : vector<4x256xi1>, vector<4x256xf32>
    %c20_164 = arith.constant 20 : index
    %c0_165 = arith.constant 0 : index
    %236 = vector.load %arg7[%c20_164, %c0_165] : memref<36x256xf32, #tpu.memory_space<vmem>>, vector<4x256xf32>
    tpu.vector_store %arg7[%c20_164, %c0_165], %235 {strides = array<i32>} : memref<36x256xf32, #tpu.memory_space<vmem>>, vector<4x256xf32>,
    %c16_i32_166 = arith.constant 16 : i32
    %237 = tpu.dynamic_rotate %215 by %c16_i32_166 dim 1 : vector<4x256xf32>, i32 -> vector<4x256xf32>
    %c240_i32_167 = arith.constant 240 : i32
    %238 = tpu.dynamic_rotate %215 by %c240_i32_167 dim 1 : vector<4x256xf32>, i32 -> vector<4x256xf32>
    %239 = arith.select %8, %237, %238 : vector<4x256xi1>, vector<4x256xf32>
    %c1_i32_168 = arith.constant 1 : i32
    %240 = tpu.dynamic_rotate %239 by %c1_i32_168 dim 1 : vector<4x256xf32>, i32 -> vector<4x256xf32>
    %c255_i32_169 = arith.constant 255 : i32
    %241 = tpu.dynamic_rotate %239 by %c255_i32_169 dim 1 : vector<4x256xf32>, i32 -> vector<4x256xf32>
    %242 = arith.select %26, %241, %240 : vector<4x256xi1>, vector<4x256xf32>
    %c24_170 = arith.constant 24 : index
    %c0_171 = arith.constant 0 : index
    %243 = vector.load %arg7[%c24_170, %c0_171] : memref<36x256xf32, #tpu.memory_space<vmem>>, vector<4x256xf32>
    tpu.vector_store %arg7[%c24_170, %c0_171], %242 {strides = array<i32>} : memref<36x256xf32, #tpu.memory_space<vmem>>, vector<4x256xf32>,
    %c28_172 = arith.constant 28 : index
    %c0_173 = arith.constant 0 : index
    %244 = vector.load %arg7[%c28_172, %c0_173] : memref<36x256xf32, #tpu.memory_space<vmem>>, vector<4x256xf32>
    tpu.vector_store %arg7[%c28_172, %c0_173], %239 {strides = array<i32>} : memref<36x256xf32, #tpu.memory_space<vmem>>, vector<4x256xf32>,
    %c1_i32_174 = arith.constant 1 : i32
    %245 = tpu.dynamic_rotate %239 by %c1_i32_174 dim 1 : vector<4x256xf32>, i32 -> vector<4x256xf32>
    %c255_i32_175 = arith.constant 255 : i32
    %246 = tpu.dynamic_rotate %239 by %c255_i32_175 dim 1 : vector<4x256xf32>, i32 -> vector<4x256xf32>
    %247 = arith.select %44, %245, %246 : vector<4x256xi1>, vector<4x256xf32>
    %c32_176 = arith.constant 32 : index
    %c0_177 = arith.constant 0 : index
    %248 = vector.load %arg7[%c32_176, %c0_177] : memref<36x256xf32, #tpu.memory_space<vmem>>, vector<4x256xf32>
    tpu.vector_store %arg7[%c32_176, %c0_177], %247 {strides = array<i32>} : memref<36x256xf32, #tpu.memory_space<vmem>>, vector<4x256xf32>,
    %c0_178 = arith.constant 0 : index
    %c0_179 = arith.constant 0 : index
    %249 = vector.load %arg7[%c0_178, %c0_179] : memref<36x256xf32, #tpu.memory_space<vmem>>, vector<36x256xf32>
    %cst_180 = arith.constant dense<0.000000e+00> : vector<4x256xf32>
    %250 = tpu.matmul %2, %249, %cst_180 {dimension_numbers = #tpu.dot_dimension_numbers<[1], [0], [0], [1], [0, 0, 1, 1], [], []>} : vector<4x36xf32>, vector<36x256xf32>, vector<4x256xf32> -> vector<4x256xf32>
    %251 = vector.broadcast %3 : vector<4x1xf32> to vector<4x256xf32>
    %252 = arith.addf %250, %251 : vector<4x256xf32>
    %cst_181 = arith.constant dense<0.000000e+00> : vector<4xf32>
    %253 = vector.multi_reduction <add>, %252, %cst_181 [1] : vector<4x256xf32> to vector<4xf32>
    %254 = vector.shape_cast %253 : vector<4xf32> to vector<4x1xf32>
    %cst_182 = arith.constant 2.560000e+02 : f32
    %255 = vector.broadcast %cst_182 : f32 to vector<4x1xf32>
    %256 = arith.divf %254, %255 : vector<4x1xf32>
    %257 = vector.broadcast %256 : vector<4x1xf32> to vector<4x256xf32>
    %258 = arith.subf %252, %257 : vector<4x256xf32>
    %259 = arith.mulf %258, %258 : vector<4x256xf32>
    %cst_183 = arith.constant dense<0.000000e+00> : vector<4xf32>
    %260 = vector.multi_reduction <add>, %259, %cst_183 [1] : vector<4x256xf32> to vector<4xf32>
    %261 = vector.shape_cast %260 : vector<4xf32> to vector<4x1xf32>
    %cst_184 = arith.constant 2.560000e+02 : f32
    %262 = vector.broadcast %cst_184 : f32 to vector<4x1xf32>
    %263 = arith.divf %261, %262 : vector<4x1xf32>
    %cst_185 = arith.constant 9.99999974E-6 : f32
    %264 = vector.broadcast %cst_185 : f32 to vector<4x1xf32>
    %265 = arith.addf %263, %264 : vector<4x1xf32>
    %266 = math.rsqrt %265 : vector<4x1xf32>
    %267 = vector.broadcast %266 : vector<4x1xf32> to vector<4x256xf32>
    %268 = arith.mulf %258, %267 : vector<4x256xf32>
    %269 = arith.addf %160, %268 : vector<4x256xf32>
    %c1_186 = arith.constant 1 : index
    %c0_187 = arith.constant 0 : index
    %c0_188 = arith.constant 0 : index
    %270 = vector.load %arg6[%c1_186, %c0_187, %c0_188] : memref<2x4x256xf32, #tpu.memory_space<vmem>>, vector<1x4x256xf32>
    %271 = vector.shape_cast %270 : vector<1x4x256xf32> to vector<4x256xf32>
    %272 = vector.shape_cast %269 : vector<4x256xf32> to vector<1x4x256xf32>
    tpu.vector_store %arg6[%c1_186, %c0_187, %c0_188], %272 {strides = array<i32>} : memref<2x4x256xf32, #tpu.memory_space<vmem>>, vector<1x4x256xf32>,
    return
  }
  func.func @transform_0(%arg0: i32) -> (i32, i32, i32) {
    %c0_i32 = arith.constant 0 : i32
    %c0_i32_0 = arith.constant 0 : i32
    %c0_i32_1 = arith.constant 0 : i32
    return %arg0, %c0_i32, %c0_i32_0 : i32, i32, i32
  }
  func.func @transform_1(%arg0: i32) -> (i32, i32) {
    %c0_i32 = arith.constant 0 : i32
    %c0_i32_0 = arith.constant 0 : i32
    %c0_i32_1 = arith.constant 0 : i32
    return %c0_i32, %c0_i32_0 : i32, i32
  }
  func.func @transform_2(%arg0: i32) -> (i32, i32) {
    %c0_i32 = arith.constant 0 : i32
    %c0_i32_0 = arith.constant 0 : i32
    %c0_i32_1 = arith.constant 0 : i32
    return %c0_i32, %c0_i32_0 : i32, i32
  }
  func.func @transform_3(%arg0: i32) -> (i32, i32) {
    %c0_i32 = arith.constant 0 : i32
    %c0_i32_0 = arith.constant 0 : i32
    %c0_i32_1 = arith.constant 0 : i32
    return %c0_i32, %c0_i32_0 : i32, i32
  }
  func.func @transform_4(%arg0: i32) -> (i32, i32) {
    %c0_i32 = arith.constant 0 : i32
    %c0_i32_0 = arith.constant 0 : i32
    %c0_i32_1 = arith.constant 0 : i32
    return %c0_i32, %c0_i32_0 : i32, i32
  }
  func.func @transform_5(%arg0: i32) -> (i32, i32, i32) {
    %c0_i32 = arith.constant 0 : i32
    %c0_i32_0 = arith.constant 0 : i32
    %c0_i32_1 = arith.constant 0 : i32
    return %arg0, %c0_i32, %c0_i32_0 : i32, i32, i32
  }
}

</mosaic_0001>

<llo_original>
// kernel: tpu_custom_call.1
$region0: #{tpu_custom_call.1}
  #allocation0 [shape = 'u32[]', space=smem, size = 0x4, offset = 0x4, fixed_abs, tag = 'smem constant byte address 0x4 - core index']
  #allocation1 [shape = 'u32[144,128]{1,0:T(1,128)}', space=vmem, size = 0x12000, scoped, tag = 'internal scratch']
  #allocation2 [shape = 'f32[36,256]{1,0:T(8,128)}', space=vmem, size = 0xa000, scoped, tag = 'scratch operand']
  %s0 = inlined_call_operand.hbm [shape: f32[2,4,256], index: 0, kind: input, shape index: {}]
  %s1 = inlined_call_operand.vmem [shape: f32[4,36], index: 1, kind: input, shape index: {}]
  %s2 = inlined_call_operand.vmem [shape: f32[4,1], index: 2, kind: input, shape index: {}]
  %s3 = inlined_call_operand.vmem [shape: f32[4,36], index: 3, kind: input, shape index: {}]
  %s4 = inlined_call_operand.vmem [shape: f32[4,1], index: 4, kind: input, shape index: {}]
  %s5 = inlined_call_operand.hbm [shape: f32[2,4,256], index: 5, kind: output, shape index: {}]
  %s6 = sld [smem:[#allocation0]]
  $region34: #{tpu_custom_call.1} parent=0
    _
  %s8 = ssub.s32 1, %s6
  %s9 = scalar_select 0, %s8, %s6
  $region1: #{tpu_custom_call.1} parent=0
    #allocation3 [shape = 'u8[8192]{0}', space=vmem, size = 0x2000, scoped, tag = 'input window, operand 0, single buffered']
    #allocation4 [shape = 's32[1]{0}', space=sflag, size = 0x4, scoped, tag = 'scoped memory for tpu_custom_call.1']
    #allocation5 [shape = 's32[1]{0}', space=sflag, size = 0x4, scoped, tag = 'scoped memory for tpu_custom_call.1']
    #allocation6 [shape = 'u8[8192]{0}', space=vmem, size = 0x2000, scoped, tag = 'output window, operand 0, single buffered']
    %10 = vsyncpa [#allocation4], 0
    %11 = vsyncpa [#allocation5], 0
    // Predicated region
    $region2: #{tpu_custom_call.1} parent=1 // pred_check
      _
    $region3: #{tpu_custom_call.1} parent=1 // pred_check_branch
      %13 = sbr.rel (0) target = $region5
    $region4: #{tpu_custom_call.1} parent=1 // pred_region
      %s15 = ssub.s32 256, 256
      %16 = vsyncadd [#allocation4], %s15
      %s17 = sshll.u32 [#allocation3], 4
      %s18 = int_to_ptr.vmem [resolvable:$true] %s17
      %23 = dma.hbm_to_vmem [thread:$0]  %s0, 256, %s18, [#allocation4], 128, 128, 8
    $region5: #{tpu_custom_call.1} parent=1 // pred_fallthru
      _
    // Predicated region
    $region6: #{tpu_custom_call.1} parent=1 // pred_check
      _
    $region7: #{tpu_custom_call.1} parent=1 // pred_check_branch
      %25 = sbr.rel (0) target = $region9
    $region8: #{tpu_custom_call.1} parent=1 // pred_region
      _
    $region9: #{tpu_custom_call.1} parent=1 // pred_fallthru
      _
    // Predicated region
    $region10: #{tpu_custom_call.1} parent=1 // pred_check
      _
    $region11: #{tpu_custom_call.1} parent=1 // pred_check_branch
      %27 = sbr.rel (0) target = $region13
    $region12: #{tpu_custom_call.1} parent=1 // pred_region
      _
    $region13: #{tpu_custom_call.1} parent=1 // pred_fallthru
      _
    // Predicated region
    $region14: #{tpu_custom_call.1} parent=1 // pred_check
      _
    $region15: #{tpu_custom_call.1} parent=1 // pred_check_branch
      %29 = sbr.rel (0) target = $region17
    $region16: #{tpu_custom_call.1} parent=1 // pred_region
      _
    $region17: #{tpu_custom_call.1} parent=1 // pred_fallthru
      _
    // Predicated region
    $region18: #{tpu_custom_call.1} parent=1 // pred_check
      _
    $region19: #{tpu_custom_call.1} parent=1 // pred_check_branch
      %31 = sbr.rel (0) target = $region21
    $region20: #{tpu_custom_call.1} parent=1 // pred_region
      _
    $region21: #{tpu_custom_call.1} parent=1 // pred_fallthru
      _
    // Predicated region
    $region22: #{tpu_custom_call.1} parent=1 // pred_check
      _
    $region23: #{tpu_custom_call.1} parent=1 // pred_check_branch
      %33 = sbr.rel (0) target = $region25
    $region24: #{tpu_custom_call.1} parent=1 // pred_region
      %34 = dma.done [#allocation4], 256
    $region25: #{tpu_custom_call.1} parent=1 // pred_fallthru
      _
    %v35 = vld [vmem:[%s1] sm:$0xf]
    %v36 = vld [vmem:[%s2] sm:$0xf]
    %v37 = vld [vmem:[%s3] sm:$0xf]
    %v38 = vld [vmem:[%s4] sm:$0xf]
    %v39 = vlaneseq
    %v40 = vand.u32 %v39, 127
    %v41 = vadd.s32 %v40, 128
    %vm42 = vcmp.lt.s32.totalorder %v40, 16
    %vm43 = vcmp.lt.s32.totalorder %v41, 16
    %vm44 = vcmp.ge.s32.totalorder %v40, 240
    %vm45 = vcmp.ge.s32.totalorder %v41, 240
    %vm46 = vcmp.lt.s32.totalorder %v40, 0
    %v47 = vsub.s32 0, %v40
    %v48 = vsel %vm46, %v47, %v40
    %v49 = vshrl.u32 %v48, 4
    %v50 = vand.u32 %v48, 15
    %v51 = vsub.s32 0, %v50
    %v52 = vsel %vm46, %v51, %v50
    %vm53 = vcmp.lt.s32.totalorder %v41, 0
    %v54 = vsub.s32 0, %v41
    %v55 = vsel %vm53, %v54, %v41
    %v56 = vshrl.u32 %v55, 4
    %v57 = vand.u32 %v55, 15
    %v58 = vsub.s32 0, %v57
    %v59 = vsel %vm53, %v58, %v57
    %vm60 = vcmp.ne.s32.totalorder %v52, 0
    %vm61 = vcmp.ne.s32.totalorder %v59, 0
    %vm62 = vcmp.lt.s32.totalorder %v52, 0
    %vm63 = vcmp.lt.s32.totalorder %v59, 0
    %vm64 = vmand %vm62, %vm60
    %vm65 = vmand %vm63, %vm61
    %v66 = vadd.s32 %v52, 16
    %v67 = vadd.s32 %v59, 16
    %v68 = vsel %vm64, %v66, %v52
    %v69 = vsel %vm65, %v67, %v59
    %vm70 = vcmp.eq.s32.totalorder %v68, 0
    %vm71 = vcmp.eq.s32.totalorder %v69, 0
    %vm72 = vcmp.eq.s32.totalorder %v68, 15
    %vm73 = vcmp.eq.s32.totalorder %v69, 15
    %v74 = vld [vmem:[#allocation3] sm:$0xff]
    %v76 = vcombine.high %v74, %v74
    %78 = vrot.lane.b32.xlu0 %v74, 16
    %v79 = vpop.permute.xlu0 %78
    %80 = vrot.lane.b32.xlu0 %v76, 16
    %v81 = vpop.permute.xlu0 %80
    %v82 = vsel %vm42, %v79, %v81
    %v83 = vsel %vm42, %v81, %v79
    %84 = vrot.lane.b32.xlu0 %v74, 112
    %v85 = vpop.permute.xlu0 %84
    %86 = vrot.lane.b32.xlu0 %v76, 112
    %v87 = vpop.permute.xlu0 %86
    %vm88 = vcmp.lt.s32.totalorder %v40, 112
    %v89 = vsel %vm88, %v85, %v87
    %v90 = vsel %vm88, %v87, %v85
    %v91 = vsel %vm42, %v89, %v83
    %v92 = vsel %vm43, %v90, %v82
    %93 = vrot.lane.b32.xlu0 %v91, 1
    %v94 = vpop.permute.xlu0 %93
    %95 = vrot.lane.b32.xlu0 %v92, 1
    %v96 = vpop.permute.xlu0 %95
    %vm97 = vcmp.lt.s32.totalorder %v40, 1
    %v98 = vsel %vm97, %v94, %v96
    %v99 = vsel %vm97, %v96, %v94
    %100 = vrot.lane.b32.xlu0 %v91, 127
    %v101 = vpop.permute.xlu0 %100
    %102 = vrot.lane.b32.xlu0 %v92, 127
    %v103 = vpop.permute.xlu0 %102
    %vm104 = vcmp.lt.s32.totalorder %v40, 127
    %v105 = vsel %vm104, %v101, %v103
    %v106 = vsel %vm104, %v103, %v101
    %v107 = vsel %vm70, %v105, %v99
    %v108 = vsel %vm71, %v106, %v98
    %109 = vst [vmem:[#allocation2] sm:$0xf] %v107
    %110 = vst [vmem:[#allocation2 + $0x8] sm:$0xf] %v108
    %v113 = vrot.slane %v91, 4
    %v114 = vrot.slane %v92, 4
    %117 = vst [vmem:[#allocation2] sm:$0xf0] %v113
    %118 = vst [vmem:[#allocation2 + $0x8] sm:$0xf0] %v114
    %v119 = vsel %vm72, %v99, %v105
    %v120 = vsel %vm73, %v98, %v106
    %121 = vst [vmem:[#allocation2 + $0x10] sm:$0xf] %v119
    %122 = vst [vmem:[#allocation2 + $0x18] sm:$0xf] %v120
    %123 = vrot.lane.b32.xlu0 %v74, 1
    %v124 = vpop.permute.xlu0 %123
    %125 = vrot.lane.b32.xlu0 %v76, 1
    %v126 = vpop.permute.xlu0 %125
    %v127 = vsel %vm97, %v124, %v126
    %v128 = vsel %vm97, %v126, %v124
    %129 = vrot.lane.b32.xlu0 %v74, 127
    %v130 = vpop.permute.xlu0 %129
    %131 = vrot.lane.b32.xlu0 %v76, 127
    %v132 = vpop.permute.xlu0 %131
    %v133 = vsel %vm104, %v130, %v132
    %v134 = vsel %vm104, %v132, %v130
    %v135 = vsel %vm70, %v133, %v128
    %v136 = vsel %vm71, %v134, %v127
    %v139 = vrot.slane %v135, 4
    %v140 = vrot.slane %v136, 4
    %143 = vst [vmem:[#allocation2 + $0x10] sm:$0xf0] %v139
    %144 = vst [vmem:[#allocation2 + $0x18] sm:$0xf0] %v140
    %145 = vst [vmem:[#allocation2 + $0x20] sm:$0xf] %v74
    %146 = vst [vmem:[#allocation2 + $0x28] sm:$0xf] %v76
    %v147 = vsel %vm72, %v128, %v133
    %v148 = vsel %vm73, %v127, %v134
    %v151 = vrot.slane %v147, 4
    %v152 = vrot.slane %v148, 4
    %155 = vst [vmem:[#allocation2 + $0x20] sm:$0xf0] %v151
    %156 = vst [vmem:[#allocation2 + $0x28] sm:$0xf0] %v152
    %v157 = vsel %vm44, %v83, %v89
    %v158 = vsel %vm45, %v82, %v90
    %159 = vrot.lane.b32.xlu0 %v157, 1
    %v160 = vpop.permute.xlu0 %159
    %161 = vrot.lane.b32.xlu0 %v158, 1
    %v162 = vpop.permute.xlu0 %161
    %v163 = vsel %vm97, %v160, %v162
    %v164 = vsel %vm97, %v162, %v160
    %165 = vrot.lane.b32.xlu0 %v157, 127
    %v166 = vpop.permute.xlu0 %165
    %167 = vrot.lane.b32.xlu0 %v158, 127
    %v168 = vpop.permute.xlu0 %167
    %v169 = vsel %vm104, %v166, %v168
    %v170 = vsel %vm104, %v168, %v166
    %v171 = vsel %vm70, %v169, %v164
    %v172 = vsel %vm71, %v170, %v163
    %173 = vst [vmem:[#allocation2 + $0x30] sm:$0xf] %v171
    %174 = vst [vmem:[#allocation2 + $0x38] sm:$0xf] %v172
    %v177 = vrot.slane %v157, 4
    %v178 = vrot.slane %v158, 4
    %181 = vst [vmem:[#allocation2 + $0x30] sm:$0xf0] %v177
    %182 = vst [vmem:[#allocation2 + $0x38] sm:$0xf0] %v178
    %v183 = vsel %vm72, %v164, %v169
    %v184 = vsel %vm73, %v163, %v170
    %185 = vst [vmem:[#allocation2 + $0x40] sm:$0xf] %v183
    %186 = vst [vmem:[#allocation2 + $0x48] sm:$0xf] %v184
    %v187 = vld [vmem:[#allocation2] sm:$0xff]
    %v188 = vld [vmem:[#allocation2 + $0x8] sm:$0xff]
    %v189 = vld [vmem:[#allocation2 + $0x10] sm:$0xff]
    %v190 = vld [vmem:[#allocation2 + $0x18] sm:$0xff]
    %v191 = vld [vmem:[#allocation2 + $0x20] sm:$0xff]
    %v192 = vld [vmem:[#allocation2 + $0x28] sm:$0xff]
    %v193 = vld [vmem:[#allocation2 + $0x30] sm:$0xff]
    %v194 = vld [vmem:[#allocation2 + $0x38] sm:$0xff]
    %v195 = vld [vmem:[#allocation2 + $0x40] sm:$0xf]
    %v196 = vld [vmem:[#allocation2 + $0x48] sm:$0xf]
    %198 = vset.pattern.permute.xlu0 0
    %199 = vperm.xlu0 %198, %v36
    %v200 = vpop.permute.xlu0 %199
    %vm202 = vcmask 293888
    %v204 = vsel %vm202, %v35, 0
    %vm206 = vcmask 1043456
    %v208 = vsel %vm206, %v195, 0
    %v211 = vsel %vm206, %v196, 0
    %213 = vmatprep.subr.mxu0 %v188
    %214 = vmatpush1.msra.mxu0 %v187
    %215 = vmatprep.subr.mxu0 %v190
    %216 = vmatpush1.msra.mxu0 %v189
    %217 = vmatprep.subr.mxu0 %v192
    %218 = vmatpush1.msra.mxu0 %v191
    %219 = vmatprep.subr.mxu0 %v194
    %220 = vmatpush1.msra.mxu0 %v193
    %221 = vmatprep.subr.mxu0 %v211
    %222 = vmatpush1.msra.mxu0 %v208
    %223 = vmatprep.subr.mxu0 0.0
    %224 = vmatpush1.msra.mxu0 0.0
    %225 = vmatprep.subr.mxu0 0.0
    %226 = vmatpush1.msra.mxu0 0.0
    %227 = vmatprep.subr.mxu0 0.0
    %228 = vmatpush1.msra.mxu0 0.0
    %229 = vmatprep.subr.mxu0 0.0
    %230 = vmatpush1.msra.mxu0 0.0
    %231 = vmatprep.subr.mxu0 0.0
    %232 = vmatpush1.msra.mxu0 0.0
    %233 = vmatprep.subr.mxu0 0.0
    %234 = vmatpush1.msra.mxu0 0.0
    %235 = vmatprep.subr.mxu0 0.0
    %236 = vmatpush1.msra.mxu0 0.0
    %237 = vmatprep.subr.mxu0 0.0
    %238 = vmatpush1.msra.mxu0 0.0
    %239 = vmatprep.subr.mxu0 0.0
    %240 = vmatpush1.msra.mxu0 0.0
    %241 = vmatprep.subr.mxu0 0.0
    %242 = vmatpush1.msra.mxu0 0.0
    %243 = vmatprep.subr.mxu0 0.0
    %244 = vmatpush1.msra.mxu0 0.0
    %245 = vmatprep.subr.mxu0 0.0
    %246 = vmatpush1.msra.mxu0 0.0
    %247 = vmatprep.subr.mxu0 0.0
    %248 = vmatpush1.msra.mxu0 0.0
    %249 = vmatprep.subr.mxu0 0.0
    %250 = vmatpush1.msra.mxu0 0.0
    %251 = vmatprep.subr.mxu0 0.0
    %252 = vmatpush1.msra.mxu0 0.0
    %253 = vmatprep.subr.mxu0 0.0
    %254 = vmatpush1.msra.mxu0 0.0
    %255 = vmatprep.subr.mxu0 0.0
    %256 = vmatpush1.msra.mxu0 0.0
    %257 = vmatprep.subr.mxu0 0.0
    %258 = vmatpush1.msra.mxu0 0.0
    %259 = vmatprep.subr.mxu0 0.0
    %260 = vmatpush1.msra.mxu0 0.0
    %261 = vmatprep.subr.mxu0 0.0
    %262 = vmatpush1.msra.mxu0 0.0
    %263 = vmatprep.subr.mxu0 0.0
    %264 = vmatpush1.msra.mxu0 0.0
    %265 = vmatprep.subr.mxu0 0.0
    %266 = vmatpush1.msra.mxu0 0.0
    %267 = vmatprep.subr.mxu0 0.0
    %268 = vmatpush1.msra.mxu0 0.0
    %269 = vmatprep.subr.mxu0 0.0
    %270 = vmatpush1.msra.mxu0 0.0
    %271 = vmatprep.subr.mxu0 0.0
    %272 = vmatpush1.msra.mxu0 0.0
    %273 = vmatprep.subr.mxu0 0.0
    %274 = vmatpush1.msra.mxu0 0.0
    %275 = vmatprep.subr.mxu0 0.0
    %276 = vmatpush1.msra.mxu0 0.0
    %277 = vmatprep.mubr.f32.mxu0 0.0
    %278 = vmatmul.mubr.f32.gmra.mrb[0].mxu0 %v204
    %v279 = vpop.f32.mrb[0].mxu0
    %v280 = vadd.f32 %v200, %v279
    %v281 = vpop.f32.mrb[0].mxu0
    %v282 = vadd.f32 %v200, %v281
    %283 = vdwg.mxu0
    %v284 = vsel %vm206, %v280, 0.0
    %v285 = vsel %vm206, %v282, 0.0
    %v286 = vadd.f32 %v284, %v285
    %287 = vadd.xlane.f32.xlu0 %v286
    %v288 = vpop.xlane.xlu0 %287
    %v289 = vrcp.pop 256.0
    %v290 = vmul.f32 %v288, %v289
    %v291 = vsub.f32 %v280, %v290
    %v292 = vsub.f32 %v282, %v290
    %v293 = vmul.f32 %v291, %v291
    %v294 = vmul.f32 %v292, %v292
    %v295 = vsel %vm206, %v293, 0.0
    %v296 = vsel %vm206, %v294, 0.0
    %v297 = vadd.f32 %v295, %v296
    %298 = vadd.xlane.f32.xlu0 %v297
    %v299 = vpop.xlane.xlu0 %298
    %v300 = vmul.f32 %v299, %v289
    %v301 = vadd.f32 %v300, 1e-05
    %v302 = vrsqrt.pop %v301
    %v303 = vmul.f32 %v291, %v302
    %v304 = vmul.f32 %v292, %v302
    %v305 = vmax.f32 %v303, 0.0
    %v306 = vmax.f32 %v304, 0.0
    %307 = vrot.lane.b32.xlu0 %v305, 16
    %v308 = vpop.permute.xlu0 %307
    %309 = vrot.lane.b32.xlu0 %v306, 16
    %v310 = vpop.permute.xlu0 %309
    %v311 = vsel %vm42, %v308, %v310
    %v312 = vsel %vm42, %v310, %v308
    %313 = vrot.lane.b32.xlu0 %v305, 112
    %v314 = vpop.permute.xlu0 %313
    %315 = vrot.lane.b32.xlu0 %v306, 112
    %v316 = vpop.permute.xlu0 %315
    %v317 = vsel %vm88, %v314, %v316
    %v318 = vsel %vm88, %v316, %v314
    %v319 = vsel %vm42, %v317, %v312
    %v320 = vsel %vm43, %v318, %v311
    %321 = vrot.lane.b32.xlu0 %v319, 1
    %v322 = vpop.permute.xlu0 %321
    %323 = vrot.lane.b32.xlu0 %v320, 1
    %v324 = vpop.permute.xlu0 %323
    %v325 = vsel %vm97, %v322, %v324
    %v326 = vsel %vm97, %v324, %v322
    %327 = vrot.lane.b32.xlu0 %v319, 127
    %v328 = vpop.permute.xlu0 %327
    %329 = vrot.lane.b32.xlu0 %v320, 127
    %v330 = vpop.permute.xlu0 %329
    %v331 = vsel %vm104, %v328, %v330
    %v332 = vsel %vm104, %v330, %v328
    %v333 = vsel %vm70, %v331, %v326
    %v334 = vsel %vm71, %v332, %v325
    %335 = vst [vmem:[#allocation2] sm:$0xf] %v333
    %336 = vst [vmem:[#allocation2 + $0x8] sm:$0xf] %v334
    %v339 = vrot.slane %v319, 4
    %v340 = vrot.slane %v320, 4
    %343 = vst [vmem:[#allocation2] sm:$0xf0] %v339
    %344 = vst [vmem:[#allocation2 + $0x8] sm:$0xf0] %v340
    %v345 = vsel %vm72, %v326, %v331
    %v346 = vsel %vm73, %v325, %v332
    %347 = vst [vmem:[#allocation2 + $0x10] sm:$0xf] %v345
    %348 = vst [vmem:[#allocation2 + $0x18] sm:$0xf] %v346
    %349 = vrot.lane.b32.xlu0 %v305, 1
    %v350 = vpop.permute.xlu0 %349
    %351 = vrot.lane.b32.xlu0 %v306, 1
    %v352 = vpop.permute.xlu0 %351
    %v353 = vsel %vm97, %v350, %v352
    %v354 = vsel %vm97, %v352, %v350
    %355 = vrot.lane.b32.xlu0 %v305, 127
    %v356 = vpop.permute.xlu0 %355
    %357 = vrot.lane.b32.xlu0 %v306, 127
    %v358 = vpop.permute.xlu0 %357
    %v359 = vsel %vm104, %v356, %v358
    %v360 = vsel %vm104, %v358, %v356
    %v361 = vsel %vm70, %v359, %v354
    %v362 = vsel %vm71, %v360, %v353
    %v365 = vrot.slane %v361, 4
    %v366 = vrot.slane %v362, 4
    %369 = vst [vmem:[#allocation2 + $0x10] sm:$0xf0] %v365
    %370 = vst [vmem:[#allocation2 + $0x18] sm:$0xf0] %v366
    %371 = vst [vmem:[#allocation2 + $0x20] sm:$0xf] %v305
    %372 = vst [vmem:[#allocation2 + $0x28] sm:$0xf] %v306
    %v373 = vsel %vm72, %v354, %v359
    %v374 = vsel %vm73, %v353, %v360
    %v377 = vrot.slane %v373, 4
    %v378 = vrot.slane %v374, 4
    %381 = vst [vmem:[#allocation2 + $0x20] sm:$0xf0] %v377
    %382 = vst [vmem:[#allocation2 + $0x28] sm:$0xf0] %v378
    %v383 = vsel %vm44, %v312, %v317
    %v384 = vsel %vm45, %v311, %v318
    %385 = vrot.lane.b32.xlu0 %v383, 1
    %v386 = vpop.permute.xlu0 %385
    %387 = vrot.lane.b32.xlu0 %v384, 1
    %v388 = vpop.permute.xlu0 %387
    %v389 = vsel %vm97, %v386, %v388
    %v390 = vsel %vm97, %v388, %v386
    %391 = vrot.lane.b32.xlu0 %v383, 127
    %v392 = vpop.permute.xlu0 %391
    %393 = vrot.lane.b32.xlu0 %v384, 127
    %v394 = vpop.permute.xlu0 %393
    %v395 = vsel %vm104, %v392, %v394
    %v396 = vsel %vm104, %v394, %v392
    %v397 = vsel %vm70, %v395, %v390
    %v398 = vsel %vm71, %v396, %v389
    %399 = vst [vmem:[#allocation2 + $0x30] sm:$0xf] %v397
    %400 = vst [vmem:[#allocation2 + $0x38] sm:$0xf] %v398
    %v403 = vrot.slane %v383, 4
    %v404 = vrot.slane %v384, 4
    %407 = vst [vmem:[#allocation2 + $0x30] sm:$0xf0] %v403
    %408 = vst [vmem:[#allocation2 + $0x38] sm:$0xf0] %v404
    %v409 = vsel %vm72, %v390, %v395
    %v410 = vsel %vm73, %v389, %v396
    %411 = vst [vmem:[#allocation2 + $0x40] sm:$0xf] %v409
    %412 = vst [vmem:[#allocation2 + $0x48] sm:$0xf] %v410
    %v413 = vld [vmem:[#allocation2] sm:$0xff]
    %v414 = vld [vmem:[#allocation2 + $0x8] sm:$0xff]
    %v415 = vld [vmem:[#allocation2 + $0x10] sm:$0xff]
    %v416 = vld [vmem:[#allocation2 + $0x18] sm:$0xff]
    %v417 = vld [vmem:[#allocation2 + $0x20] sm:$0xff]
    %v418 = vld [vmem:[#allocation2 + $0x28] sm:$0xff]
    %v419 = vld [vmem:[#allocation2 + $0x30] sm:$0xff]
    %v420 = vld [vmem:[#allocation2 + $0x38] sm:$0xff]
    %v421 = vld [vmem:[#allocation2 + $0x40] sm:$0xf]
    %v422 = vld [vmem:[#allocation2 + $0x48] sm:$0xf]
    %424 = vset.pattern.permute.xlu0 0
    %425 = vperm.xlu0 %424, %v38
    %v426 = vpop.permute.xlu0 %425
    %v429 = vsel %vm202, %v37, 0
    %v432 = vsel %vm206, %v421, 0
    %v435 = vsel %vm206, %v422, 0
    %437 = vmatprep.subr.mxu0 %v414
    %438 = vmatpush1.msra.mxu0 %v413
    %439 = vmatprep.subr.mxu0 %v416
    %440 = vmatpush1.msra.mxu0 %v415
    %441 = vmatprep.subr.mxu0 %v418
    %442 = vmatpush1.msra.mxu0 %v417
    %443 = vmatprep.subr.mxu0 %v420
    %444 = vmatpush1.msra.mxu0 %v419
    %445 = vmatprep.subr.mxu0 %v435
    %446 = vmatpush1.msra.mxu0 %v432
    %447 = vmatprep.subr.mxu0 0.0
    %448 = vmatpush1.msra.mxu0 0.0
    %449 = vmatprep.subr.mxu0 0.0
    %450 = vmatpush1.msra.mxu0 0.0
    %451 = vmatprep.subr.mxu0 0.0
    %452 = vmatpush1.msra.mxu0 0.0
    %453 = vmatprep.subr.mxu0 0.0
    %454 = vmatpush1.msra.mxu0 0.0
    %455 = vmatprep.subr.mxu0 0.0
    %456 = vmatpush1.msra.mxu0 0.0
    %457 = vmatprep.subr.mxu0 0.0
    %458 = vmatpush1.msra.mxu0 0.0
    %459 = vmatprep.subr.mxu0 0.0
    %460 = vmatpush1.msra.mxu0 0.0
    %461 = vmatprep.subr.mxu0 0.0
    %462 = vmatpush1.msra.mxu0 0.0
    %463 = vmatprep.subr.mxu0 0.0
    %464 = vmatpush1.msra.mxu0 0.0
    %465 = vmatprep.subr.mxu0 0.0
    %466 = vmatpush1.msra.mxu0 0.0
    %467 = vmatprep.subr.mxu0 0.0
    %468 = vmatpush1.msra.mxu0 0.0
    %469 = vmatprep.subr.mxu0 0.0
    %470 = vmatpush1.msra.mxu0 0.0
    %471 = vmatprep.subr.mxu0 0.0
    %472 = vmatpush1.msra.mxu0 0.0
    %473 = vmatprep.subr.mxu0 0.0
    %474 = vmatpush1.msra.mxu0 0.0
    %475 = vmatprep.subr.mxu0 0.0
    %476 = vmatpush1.msra.mxu0 0.0
    %477 = vmatprep.subr.mxu0 0.0
    %478 = vmatpush1.msra.mxu0 0.0
    %479 = vmatprep.subr.mxu0 0.0
    %480 = vmatpush1.msra.mxu0 0.0
    %481 = vmatprep.subr.mxu0 0.0
    %482 = vmatpush1.msra.mxu0 0.0
    %483 = vmatprep.subr.mxu0 0.0
    %484 = vmatpush1.msra.mxu0 0.0
    %485 = vmatprep.subr.mxu0 0.0
    %486 = vmatpush1.msra.mxu0 0.0
    %487 = vmatprep.subr.mxu0 0.0
    %488 = vmatpush1.msra.mxu0 0.0
    %489 = vmatprep.subr.mxu0 0.0
    %490 = vmatpush1.msra.mxu0 0.0
    %491 = vmatprep.subr.mxu0 0.0
    %492 = vmatpush1.msra.mxu0 0.0
    %493 = vmatprep.subr.mxu0 0.0
    %494 = vmatpush1.msra.mxu0 0.0
    %495 = vmatprep.subr.mxu0 0.0
    %496 = vmatpush1.msra.mxu0 0.0
    %497 = vmatprep.subr.mxu0 0.0
    %498 = vmatpush1.msra.mxu0 0.0
    %499 = vmatprep.subr.mxu0 0.0
    %500 = vmatpush1.msra.mxu0 0.0
    %501 = vmatprep.mubr.f32.mxu0 0.0
    %502 = vmatmul.mubr.f32.gmra.mrb[0].mxu0 %v429
    %v503 = vpop.f32.mrb[0].mxu0
    %v504 = vadd.f32 %v426, %v503
    %v505 = vpop.f32.mrb[0].mxu0
    %v506 = vadd.f32 %v426, %v505
    %507 = vdwg.mxu0
    %v508 = vsel %vm206, %v504, 0.0
    %v509 = vsel %vm206, %v506, 0.0
    %v510 = vadd.f32 %v508, %v509
    %511 = vadd.xlane.f32.xlu0 %v510
    %v512 = vpop.xlane.xlu0 %511
    %v513 = vmul.f32 %v512, %v289
    %v514 = vsub.f32 %v504, %v513
    %v515 = vsub.f32 %v506, %v513
    %v516 = vmul.f32 %v514, %v514
    %v517 = vmul.f32 %v515, %v515
    %v518 = vsel %vm206, %v516, 0.0
    %v519 = vsel %vm206, %v517, 0.0
    %v520 = vadd.f32 %v518, %v519
    %521 = vadd.xlane.f32.xlu0 %v520
    %v522 = vpop.xlane.xlu0 %521
    %v523 = vmul.f32 %v522, %v289
    %v524 = vadd.f32 %v523, 1e-05
    %v525 = vrsqrt.pop %v524
    %v526 = vmul.f32 %v514, %v525
    %v527 = vmul.f32 %v515, %v525
    %v530 = vcombine.low %v526, %v527
    %v532 = vadd.f32 %v74, %v530
    %533 = vst [vmem:[#allocation6] sm:$0xff] %v532
    %s534 = scalar_lea.vmem [#allocation3], 8
    %v535 = vld [vmem:[%s534] sm:$0xff]
    %v537 = vcombine.high %v535, %v535
    %539 = vrot.lane.b32.xlu0 %v535, 16
    %v540 = vpop.permute.xlu0 %539
    %541 = vrot.lane.b32.xlu0 %v537, 16
    %v542 = vpop.permute.xlu0 %541
    %v543 = vsel %vm42, %v540, %v542
    %v544 = vsel %vm42, %v542, %v540
    %545 = vrot.lane.b32.xlu0 %v535, 112
    %v546 = vpop.permute.xlu0 %545
    %547 = vrot.lane.b32.xlu0 %v537, 112
    %v548 = vpop.permute.xlu0 %547
    %v549 = vsel %vm88, %v546, %v548
    %v550 = vsel %vm88, %v548, %v546
    %v551 = vsel %vm42, %v549, %v544
    %v552 = vsel %vm43, %v550, %v543
    %553 = vrot.lane.b32.xlu0 %v551, 1
    %v554 = vpop.permute.xlu0 %553
    %555 = vrot.lane.b32.xlu0 %v552, 1
    %v556 = vpop.permute.xlu0 %555
    %v557 = vsel %vm97, %v554, %v556
    %v558 = vsel %vm97, %v556, %v554
    %559 = vrot.lane.b32.xlu0 %v551, 127
    %v560 = vpop.permute.xlu0 %559
    %561 = vrot.lane.b32.xlu0 %v552, 127
    %v562 = vpop.permute.xlu0 %561
    %v563 = vsel %vm104, %v560, %v562
    %v564 = vsel %vm104, %v562, %v560
    %v565 = vsel %vm70, %v563, %v558
    %v566 = vsel %vm71, %v564, %v557
    %567 = vst [vmem:[#allocation2] sm:$0xf] %v565
    %568 = vst [vmem:[#allocation2 + $0x8] sm:$0xf] %v566
    %v571 = vrot.slane %v551, 4
    %v572 = vrot.slane %v552, 4
    %575 = vst [vmem:[#allocation2] sm:$0xf0] %v571
    %576 = vst [vmem:[#allocation2 + $0x8] sm:$0xf0] %v572
    %v577 = vsel %vm72, %v558, %v563
    %v578 = vsel %vm73, %v557, %v564
    %579 = vst [vmem:[#allocation2 + $0x10] sm:$0xf] %v577
    %580 = vst [vmem:[#allocation2 + $0x18] sm:$0xf] %v578
    %581 = vrot.lane.b32.xlu0 %v535, 1
    %v582 = vpop.permute.xlu0 %581
    %583 = vrot.lane.b32.xlu0 %v537, 1
    %v584 = vpop.permute.xlu0 %583
    %v585 = vsel %vm97, %v582, %v584
    %v586 = vsel %vm97, %v584, %v582
    %587 = vrot.lane.b32.xlu0 %v535, 127
    %v588 = vpop.permute.xlu0 %587
    %589 = vrot.lane.b32.xlu0 %v537, 127
    %v590 = vpop.permute.xlu0 %589
    %v591 = vsel %vm104, %v588, %v590
    %v592 = vsel %vm104, %v590, %v588
    %v593 = vsel %vm70, %v591, %v586
    %v594 = vsel %vm71, %v592, %v585
    %v597 = vrot.slane %v593, 4
    %v598 = vrot.slane %v594, 4
    %601 = vst [vmem:[#allocation2 + $0x10] sm:$0xf0] %v597
    %602 = vst [vmem:[#allocation2 + $0x18] sm:$0xf0] %v598
    %603 = vst [vmem:[#allocation2 + $0x20] sm:$0xf] %v535
    %604 = vst [vmem:[#allocation2 + $0x28] sm:$0xf] %v537
    %v605 = vsel %vm72, %v586, %v591
    %v606 = vsel %vm73, %v585, %v592
    %v609 = vrot.slane %v605, 4
    %v610 = vrot.slane %v606, 4
    %613 = vst [vmem:[#allocation2 + $0x20] sm:$0xf0] %v609
    %614 = vst [vmem:[#allocation2 + $0x28] sm:$0xf0] %v610
    %v615 = vsel %vm44, %v544, %v549
    %v616 = vsel %vm45, %v543, %v550
    %617 = vrot.lane.b32.xlu0 %v615, 1
    %v618 = vpop.permute.xlu0 %617
    %619 = vrot.lane.b32.xlu0 %v616, 1
    %v620 = vpop.permute.xlu0 %619
    %v621 = vsel %vm97, %v618, %v620
    %v622 = vsel %vm97, %v620, %v618
    %623 = vrot.lane.b32.xlu0 %v615, 127
    %v624 = vpop.permute.xlu0 %623
    %625 = vrot.lane.b32.xlu0 %v616, 127
    %v626 = vpop.permute.xlu0 %625
    %v627 = vsel %vm104, %v624, %v626
    %v628 = vsel %vm104, %v626, %v624
    %v629 = vsel %vm70, %v627, %v622
    %v630 = vsel %vm71, %v628, %v621
    %631 = vst [vmem:[#allocation2 + $0x30] sm:$0xf] %v629
    %632 = vst [vmem:[#allocation2 + $0x38] sm:$0xf] %v630
    %v635 = vrot.slane %v615, 4
    %v636 = vrot.slane %v616, 4
    %639 = vst [vmem:[#allocation2 + $0x30] sm:$0xf0] %v635
    %640 = vst [vmem:[#allocation2 + $0x38] sm:$0xf0] %v636
    %v641 = vsel %vm72, %v622, %v627
    %v642 = vsel %vm73, %v621, %v628
    %643 = vst [vmem:[#allocation2 + $0x40] sm:$0xf] %v641
    %644 = vst [vmem:[#allocation2 + $0x48] sm:$0xf] %v642
    %v645 = vld [vmem:[#allocation2] sm:$0xff]
    %v646 = vld [vmem:[#allocation2 + $0x8] sm:$0xff]
    %v647 = vld [vmem:[#allocation2 + $0x10] sm:$0xff]
    %v648 = vld [vmem:[#allocation2 + $0x18] sm:$0xff]
    %v649 = vld [vmem:[#allocation2 + $0x20] sm:$0xff]
    %v650 = vld [vmem:[#allocation2 + $0x28] sm:$0xff]
    %v651 = vld [vmem:[#allocation2 + $0x30] sm:$0xff]
    %v652 = vld [vmem:[#allocation2 + $0x38] sm:$0xff]
    %v653 = vld [vmem:[#allocation2 + $0x40] sm:$0xf]
    %v654 = vld [vmem:[#allocation2 + $0x48] sm:$0xf]
    %v656 = vsel %vm206, %v653, 0
    %v659 = vsel %vm206, %v654, 0
    %661 = vmatprep.subr.mxu0 %v646
    %662 = vmatpush1.msra.mxu0 %v645
    %663 = vmatprep.subr.mxu0 %v648
    %664 = vmatpush1.msra.mxu0 %v647
    %665 = vmatprep.subr.mxu0 %v650
    %666 = vmatpush1.msra.mxu0 %v649
    %667 = vmatprep.subr.mxu0 %v652
    %668 = vmatpush1.msra.mxu0 %v651
    %669 = vmatprep.subr.mxu0 %v659
    %670 = vmatpush1.msra.mxu0 %v656
    %671 = vmatprep.subr.mxu0 0.0
    %672 = vmatpush1.msra.mxu0 0.0
    %673 = vmatprep.subr.mxu0 0.0
    %674 = vmatpush1.msra.mxu0 0.0
    %675 = vmatprep.subr.mxu0 0.0
    %676 = vmatpush1.msra.mxu0 0.0
    %677 = vmatprep.subr.mxu0 0.0
    %678 = vmatpush1.msra.mxu0 0.0
    %679 = vmatprep.subr.mxu0 0.0
    %680 = vmatpush1.msra.mxu0 0.0
    %681 = vmatprep.subr.mxu0 0.0
    %682 = vmatpush1.msra.mxu0 0.0
    %683 = vmatprep.subr.mxu0 0.0
    %684 = vmatpush1.msra.mxu0 0.0
    %685 = vmatprep.subr.mxu0 0.0
    %686 = vmatpush1.msra.mxu0 0.0
    %687 = vmatprep.subr.mxu0 0.0
    %688 = vmatpush1.msra.mxu0 0.0
    %689 = vmatprep.subr.mxu0 0.0
    %690 = vmatpush1.msra.mxu0 0.0
    %691 = vmatprep.subr.mxu0 0.0
    %692 = vmatpush1.msra.mxu0 0.0
    %693 = vmatprep.subr.mxu0 0.0
    %694 = vmatpush1.msra.mxu0 0.0
    %695 = vmatprep.subr.mxu0 0.0
    %696 = vmatpush1.msra.mxu0 0.0
    %697 = vmatprep.subr.mxu0 0.0
    %698 = vmatpush1.msra.mxu0 0.0
    %699 = vmatprep.subr.mxu0 0.0
    %700 = vmatpush1.msra.mxu0 0.0
    %701 = vmatprep.subr.mxu0 0.0
    %702 = vmatpush1.msra.mxu0 0.0
    %703 = vmatprep.subr.mxu0 0.0
    %704 = vmatpush1.msra.mxu0 0.0
    %705 = vmatprep.subr.mxu0 0.0
    %706 = vmatpush1.msra.mxu0 0.0
    %707 = vmatprep.subr.mxu0 0.0
    %708 = vmatpush1.msra.mxu0 0.0
    %709 = vmatprep.subr.mxu0 0.0
    %710 = vmatpush1.msra.mxu0 0.0
    %711 = vmatprep.subr.mxu0 0.0
    %712 = vmatpush1.msra.mxu0 0.0
    %713 = vmatprep.subr.mxu0 0.0
    %714 = vmatpush1.msra.mxu0 0.0
    %715 = vmatprep.subr.mxu0 0.0
    %716 = vmatpush1.msra.mxu0 0.0
    %717 = vmatprep.subr.mxu0 0.0
    %718 = vmatpush1.msra.mxu0 0.0
    %719 = vmatprep.subr.mxu0 0.0
    %720 = vmatpush1.msra.mxu0 0.0
    %721 = vmatprep.subr.mxu0 0.0
    %722 = vmatpush1.msra.mxu0 0.0
    %723 = vmatprep.subr.mxu0 0.0
    %724 = vmatpush1.msra.mxu0 0.0
    %725 = vmatprep.mubr.f32.mxu0 0.0
    %726 = vmatmul.mubr.f32.gmra.mrb[0].mxu0 %v204
    %v727 = vpop.f32.mrb[0].mxu0
    %v728 = vadd.f32 %v200, %v727
    %v729 = vpop.f32.mrb[0].mxu0
    %v730 = vadd.f32 %v200, %v729
    %731 = vdwg.mxu0
    %v732 = vsel %vm206, %v728, 0.0
    %v733 = vsel %vm206, %v730, 0.0
    %v734 = vadd.f32 %v732, %v733
    %735 = vadd.xlane.f32.xlu0 %v734
    %v736 = vpop.xlane.xlu0 %735
    %v737 = vmul.f32 %v736, %v289
    %v738 = vsub.f32 %v728, %v737
    %v739 = vsub.f32 %v730, %v737
    %v740 = vmul.f32 %v738, %v738
    %v741 = vmul.f32 %v739, %v739
    %v742 = vsel %vm206, %v740, 0.0
    %v743 = vsel %vm206, %v741, 0.0
    %v744 = vadd.f32 %v742, %v743
    %745 = vadd.xlane.f32.xlu0 %v744
    %v746 = vpop.xlane.xlu0 %745
    %v747 = vmul.f32 %v746, %v289
    %v748 = vadd.f32 %v747, 1e-05
    %v749 = vrsqrt.pop %v748
    %v750 = vmul.f32 %v738, %v749
    %v751 = vmul.f32 %v739, %v749
    %v752 = vmax.f32 %v750, 0.0
    %v753 = vmax.f32 %v751, 0.0
    %754 = vrot.lane.b32.xlu0 %v752, 16
    %v755 = vpop.permute.xlu0 %754
    %756 = vrot.lane.b32.xlu0 %v753, 16
    %v757 = vpop.permute.xlu0 %756
    %v758 = vsel %vm42, %v755, %v757
    %v759 = vsel %vm42, %v757, %v755
    %760 = vrot.lane.b32.xlu0 %v752, 112
    %v761 = vpop.permute.xlu0 %760
    %762 = vrot.lane.b32.xlu0 %v753, 112
    %v763 = vpop.permute.xlu0 %762
    %v764 = vsel %vm88, %v761, %v763
    %v765 = vsel %vm88, %v763, %v761
    %v766 = vsel %vm42, %v764, %v759
    %v767 = vsel %vm43, %v765, %v758
    %768 = vrot.lane.b32.xlu0 %v766, 1
    %v769 = vpop.permute.xlu0 %768
    %770 = vrot.lane.b32.xlu0 %v767, 1
    %v771 = vpop.permute.xlu0 %770
    %v772 = vsel %vm97, %v769, %v771
    %v773 = vsel %vm97, %v771, %v769
    %774 = vrot.lane.b32.xlu0 %v766, 127
    %v775 = vpop.permute.xlu0 %774
    %776 = vrot.lane.b32.xlu0 %v767, 127
    %v777 = vpop.permute.xlu0 %776
    %v778 = vsel %vm104, %v775, %v777
    %v779 = vsel %vm104, %v777, %v775
    %v780 = vsel %vm70, %v778, %v773
    %v781 = vsel %vm71, %v779, %v772
    %782 = vst [vmem:[#allocation2] sm:$0xf] %v780
    %783 = vst [vmem:[#allocation2 + $0x8] sm:$0xf] %v781
    %v786 = vrot.slane %v766, 4
    %v787 = vrot.slane %v767, 4
    %790 = vst [vmem:[#allocation2] sm:$0xf0] %v786
    %791 = vst [vmem:[#allocation2 + $0x8] sm:$0xf0] %v787
    %v792 = vsel %vm72, %v773, %v778
    %v793 = vsel %vm73, %v772, %v779
    %794 = vst [vmem:[#allocation2 + $0x10] sm:$0xf] %v792
    %795 = vst [vmem:[#allocation2 + $0x18] sm:$0xf] %v793
    %796 = vrot.lane.b32.xlu0 %v752, 1
    %v797 = vpop.permute.xlu0 %796
    %798 = vrot.lane.b32.xlu0 %v753, 1
    %v799 = vpop.permute.xlu0 %798
    %v800 = vsel %vm97, %v797, %v799
    %v801 = vsel %vm97, %v799, %v797
    %802 = vrot.lane.b32.xlu0 %v752, 127
    %v803 = vpop.permute.xlu0 %802
    %804 = vrot.lane.b32.xlu0 %v753, 127
    %v805 = vpop.permute.xlu0 %804
    %v806 = vsel %vm104, %v803, %v805
    %v807 = vsel %vm104, %v805, %v803
    %v808 = vsel %vm70, %v806, %v801
    %v809 = vsel %vm71, %v807, %v800
    %v812 = vrot.slane %v808, 4
    %v813 = vrot.slane %v809, 4
    %816 = vst [vmem:[#allocation2 + $0x10] sm:$0xf0] %v812
    %817 = vst [vmem:[#allocation2 + $0x18] sm:$0xf0] %v813
    %818 = vst [vmem:[#allocation2 + $0x20] sm:$0xf] %v752
    %819 = vst [vmem:[#allocation2 + $0x28] sm:$0xf] %v753
    %v820 = vsel %vm72, %v801, %v806
    %v821 = vsel %vm73, %v800, %v807
    %v824 = vrot.slane %v820, 4
    %v825 = vrot.slane %v821, 4
    %828 = vst [vmem:[#allocation2 + $0x20] sm:$0xf0] %v824
    %829 = vst [vmem:[#allocation2 + $0x28] sm:$0xf0] %v825
    %v830 = vsel %vm44, %v759, %v764
    %v831 = vsel %vm45, %v758, %v765
    %832 = vrot.lane.b32.xlu0 %v830, 1
    %v833 = vpop.permute.xlu0 %832
    %834 = vrot.lane.b32.xlu0 %v831, 1
    %v835 = vpop.permute.xlu0 %834
    %v836 = vsel %vm97, %v833, %v835
    %v837 = vsel %vm97, %v835, %v833
    %838 = vrot.lane.b32.xlu0 %v830, 127
    %v839 = vpop.permute.xlu0 %838
    %840 = vrot.lane.b32.xlu0 %v831, 127
    %v841 = vpop.permute.xlu0 %840
    %v842 = vsel %vm104, %v839, %v841
    %v843 = vsel %vm104, %v841, %v839
    %v844 = vsel %vm70, %v842, %v837
    %v845 = vsel %vm71, %v843, %v836
    %846 = vst [vmem:[#allocation2 + $0x30] sm:$0xf] %v844
    %847 = vst [vmem:[#allocation2 + $0x38] sm:$0xf] %v845
    %v850 = vrot.slane %v830, 4
    %v851 = vrot.slane %v831, 4
    %854 = vst [vmem:[#allocation2 + $0x30] sm:$0xf0] %v850
    %855 = vst [vmem:[#allocation2 + $0x38] sm:$0xf0] %v851
    %v856 = vsel %vm72, %v837, %v842
    %v857 = vsel %vm73, %v836, %v843
    %858 = vst [vmem:[#allocation2 + $0x40] sm:$0xf] %v856
    %859 = vst [vmem:[#allocation2 + $0x48] sm:$0xf] %v857
    %v860 = vld [vmem:[#allocation2] sm:$0xff]
    %v861 = vld [vmem:[#allocation2 + $0x8] sm:$0xff]
    %v862 = vld [vmem:[#allocation2 + $0x10] sm:$0xff]
    %v863 = vld [vmem:[#allocation2 + $0x18] sm:$0xff]
    %v864 = vld [vmem:[#allocation2 + $0x20] sm:$0xff]
    %v865 = vld [vmem:[#allocation2 + $0x28] sm:$0xff]
    %v866 = vld [vmem:[#allocation2 + $0x30] sm:$0xff]
    %v867 = vld [vmem:[#allocation2 + $0x38] sm:$0xff]
    %v868 = vld [vmem:[#allocation2 + $0x40] sm:$0xf]
    %v869 = vld [vmem:[#allocation2 + $0x48] sm:$0xf]
    %v871 = vsel %vm206, %v868, 0
    %v874 = vsel %vm206, %v869, 0
    %876 = vmatprep.subr.mxu0 %v861
    %877 = vmatpush1.msra.mxu0 %v860
    %878 = vmatprep.subr.mxu0 %v863
    %879 = vmatpush1.msra.mxu0 %v862
    %880 = vmatprep.subr.mxu0 %v865
    %881 = vmatpush1.msra.mxu0 %v864
    %882 = vmatprep.subr.mxu0 %v867
    %883 = vmatpush1.msra.mxu0 %v866
    %884 = vmatprep.subr.mxu0 %v874
    %885 = vmatpush1.msra.mxu0 %v871
    %886 = vmatprep.subr.mxu0 0.0
    %887 = vmatpush1.msra.mxu0 0.0
    %888 = vmatprep.subr.mxu0 0.0
    %889 = vmatpush1.msra.mxu0 0.0
    %890 = vmatprep.subr.mxu0 0.0
    %891 = vmatpush1.msra.mxu0 0.0
    %892 = vmatprep.subr.mxu0 0.0
    %893 = vmatpush1.msra.mxu0 0.0
    %894 = vmatprep.subr.mxu0 0.0
    %895 = vmatpush1.msra.mxu0 0.0
    %896 = vmatprep.subr.mxu0 0.0
    %897 = vmatpush1.msra.mxu0 0.0
    %898 = vmatprep.subr.mxu0 0.0
    %899 = vmatpush1.msra.mxu0 0.0
    %900 = vmatprep.subr.mxu0 0.0
    %901 = vmatpush1.msra.mxu0 0.0
    %902 = vmatprep.subr.mxu0 0.0
    %903 = vmatpush1.msra.mxu0 0.0
    %904 = vmatprep.subr.mxu0 0.0
    %905 = vmatpush1.msra.mxu0 0.0
    %906 = vmatprep.subr.mxu0 0.0
    %907 = vmatpush1.msra.mxu0 0.0
    %908 = vmatprep.subr.mxu0 0.0
    %909 = vmatpush1.msra.mxu0 0.0
    %910 = vmatprep.subr.mxu0 0.0
    %911 = vmatpush1.msra.mxu0 0.0
    %912 = vmatprep.subr.mxu0 0.0
    %913 = vmatpush1.msra.mxu0 0.0
    %914 = vmatprep.subr.mxu0 0.0
    %915 = vmatpush1.msra.mxu0 0.0
    %916 = vmatprep.subr.mxu0 0.0
    %917 = vmatpush1.msra.mxu0 0.0
    %918 = vmatprep.subr.mxu0 0.0
    %919 = vmatpush1.msra.mxu0 0.0
    %920 = vmatprep.subr.mxu0 0.0
    %921 = vmatpush1.msra.mxu0 0.0
    %922 = vmatprep.subr.mxu0 0.0
    %923 = vmatpush1.msra.mxu0 0.0
    %924 = vmatprep.subr.mxu0 0.0
    %925 = vmatpush1.msra.mxu0 0.0
    %926 = vmatprep.subr.mxu0 0.0
    %927 = vmatpush1.msra.mxu0 0.0
    %928 = vmatprep.subr.mxu0 0.0
    %929 = vmatpush1.msra.mxu0 0.0
    %930 = vmatprep.subr.mxu0 0.0
    %931 = vmatpush1.msra.mxu0 0.0
    %932 = vmatprep.subr.mxu0 0.0
    %933 = vmatpush1.msra.mxu0 0.0
    %934 = vmatprep.subr.mxu0 0.0
    %935 = vmatpush1.msra.mxu0 0.0
    %936 = vmatprep.subr.mxu0 0.0
    %937 = vmatpush1.msra.mxu0 0.0
    %938 = vmatprep.subr.mxu0 0.0
    %939 = vmatpush1.msra.mxu0 0.0
    %940 = vmatprep.mubr.f32.mxu0 0.0
    %941 = vmatmul.mubr.f32.gmra.mrb[0].mxu0 %v429
    %v942 = vpop.f32.mrb[0].mxu0
    %v943 = vadd.f32 %v426, %v942
    %v944 = vpop.f32.mrb[0].mxu0
    %v945 = vadd.f32 %v426, %v944
    %946 = vdwg.mxu0
    %v947 = vsel %vm206, %v943, 0.0
    %v948 = vsel %vm206, %v945, 0.0
    %v949 = vadd.f32 %v947, %v948
    %950 = vadd.xlane.f32.xlu0 %v949
    %v951 = vpop.xlane.xlu0 %950
    %v952 = vmul.f32 %v951, %v289
    %v953 = vsub.f32 %v943, %v952
    %v954 = vsub.f32 %v945, %v952
    %v955 = vmul.f32 %v953, %v953
    %v956 = vmul.f32 %v954, %v954
    %v957 = vsel %vm206, %v955, 0.0
    %v958 = vsel %vm206, %v956, 0.0
    %v959 = vadd.f32 %v957, %v958
    %960 = vadd.xlane.f32.xlu0 %v959
    %v961 = vpop.xlane.xlu0 %960
    %v962 = vmul.f32 %v961, %v289
    %v963 = vadd.f32 %v962, 1e-05
    %v964 = vrsqrt.pop %v963
    %v965 = vmul.f32 %v953, %v964
    %v966 = vmul.f32 %v954, %v964
    %v969 = vcombine.low %v965, %v966
    %v971 = vadd.f32 %v535, %v969
    %s972 = scalar_lea.vmem [#allocation6], 8
    %973 = vst [vmem:[%s972] sm:$0xff] %v971
    // Predicated region
    $region26: #{tpu_custom_call.1} parent=1 // pred_check
      _
    $region27: #{tpu_custom_call.1} parent=1 // pred_check_branch
      %975 = sbr.rel (0) target = $region29
    $region28: #{tpu_custom_call.1} parent=1 // pred_region
      %s977 = ssub.s32 256, 256
      %978 = vsyncadd [#allocation5], %s977
      %s979 = sshll.u32 [#allocation6], 4
      %s980 = int_to_ptr.vmem [resolvable:$true] %s979
      %985 = dma.vmem_to_hbm [thread:$0]  %s980, 256, %s5, [#allocation5], 128, 128, 8
    $region29: #{tpu_custom_call.1} parent=1 // pred_fallthru
      _
    // Predicated region
    $region30: #{tpu_custom_call.1} parent=1 // pred_check
      _
    $region31: #{tpu_custom_call.1} parent=1 // pred_check_branch
      %987 = sbr.rel (0) target = $region33
    $region32: #{tpu_custom_call.1} parent=1 // pred_region
      %988 = dma.done [#allocation5], 256
    $region33: #{tpu_custom_call.1} parent=1 // pred_fallthru
      _
    %989 = vsyncpa [#allocation4], 1
    %990 = vsyncpa [#allocation5], 1

</llo_original>
